<compile_context>
chip_gen: v5e
topology: v5e:2x2
jax: 0.10.0
libtpu: 0.0.40
codegen_flags: <defaults>
</compile_context>

<pallas_src>
import functools
import math

import jax
import jax.numpy as jnp
from jax.experimental import pallas as pl
from jax.experimental.pallas import tpu as pltpu


def _round_up(x, m):
    return ((x + m - 1) // m) * m


def _textcnn_kernel(win_ref, wconv_ref, mask_ref, bconv_ref, fcw_ref, fcb_ref, out_ref):
    """One batch tile.

    win_ref   : (Bt, Lp, K)   bf16   im2col windows, K = fs_max * E (lane-dense, 128 here)
    wconv_ref : (K, Npad)     bf16   fused per-tap conv weights (lane-padded)
    mask_ref  : (Lp, Npad)    f32    0 at valid conv positions of each group, -1e30 else
    bconv_ref : (1, Npad)     f32    fused conv bias (padded lanes zero)
    fcw_ref   : (Npad, Cpad)  bf16   FC weight (padded rows/cols zero)
    fcb_ref   : (1, Cpad)     f32
    out_ref   : (Bt, Cpad)    f32    lane-dense output; wrapper slices [:, :C]
    """
    # Conv for all filter sizes / taps at once: one K=128 MXU matmul.
    conv = jax.lax.dot_general(
        win_ref[...], wconv_ref[...],
        dimension_numbers=(((2,), (0,)), ((), ())),
        preferred_element_type=jnp.float32)              # (Bt, Lp, Npad) f32

    # Mask invalid conv positions, max-over-time, then bias + ReLU.
    # (Exact reorder: max commutes with +const, ReLU is monotone.)
    # NOTE: the -1e30 additive mask is only safe because the accumulator is f32.
    pooled = jnp.max(conv + mask_ref[...], axis=1)       # (Bt, Npad)
    pooled = jnp.maximum(pooled + bconv_ref[...], 0.0)   # (Bt, Npad) f32

    out_ref[...] = (jnp.dot(pooled.astype(jnp.bfloat16), fcw_ref[...],
                            preferred_element_type=jnp.float32) + fcb_ref[...])


def init_params(key, vocab_size, embedding_dim, num_filters, filter_sizes,
                num_classes, padding_idx):
    """Same parameterization as the PyTorch module (f32, PyTorch layouts)."""
    n = len(filter_sizes)
    keys = jax.random.split(key, 3 + 2 * n)
    params = {}

    # nn.Embedding: N(0, 1), padding_idx row zeroed.
    emb = jax.random.normal(keys[0], (vocab_size, embedding_dim), jnp.float32)
    emb = emb.at[padding_idx].set(0.0)
    params["embedding"] = emb

    # nn.Conv2d(1, F, (fs, E)): uniform(+-1/sqrt(fan_in)), fan_in = fs*E.
    for i, fs in enumerate(filter_sizes):
        bound = 1.0 / math.sqrt(fs * embedding_dim)
        kw, kb = jax.random.split(keys[1 + i])
        params[f"conv{fs}_w"] = jax.random.uniform(
            kw, (num_filters, fs, embedding_dim), jnp.float32, -bound, bound)
        params[f"conv{fs}_b"] = jax.random.uniform(
            kb, (1, num_filters), jnp.float32, -bound, bound)

    # nn.Linear(n*F, C)
    fan_in = n * num_filters
    bound = 1.0 / math.sqrt(fan_in)
    kw, kb = jax.random.split(keys[1 + n])
    params["fc_w_t"] = jax.random.uniform(
        kw, (fan_in, num_classes), jnp.float32, -bound, bound)   # stored transposed
    params["fc_b"] = jax.random.uniform(
        kb, (1, num_classes), jnp.float32, -bound, bound)
    return params


def pack_params(params, *, filter_sizes, num_filters, embedding_dim, num_classes):
    """One-time host-side repack into the fused, lane-padded kernel layout."""
    n = len(filter_sizes)
    fs_max = max(filter_sizes)
    total = n * num_filters
    npad = max(128, _round_up(total, 128))
    kdim = fs_max * embedding_dim                       # im2col contraction depth
    cpad = max(128, _round_up(num_classes, 128))        # lane-dense FC output

    # Fused conv weight: row (k*E + e), col (i*F + f) = conv{fs_i}_w[f, k, e]; zero for k >= fs_i.
    conv_w = jnp.zeros((kdim, npad), jnp.float32)
    conv_b = jnp.zeros((1, npad), jnp.float32)
    for i, fs in enumerate(filter_sizes):
        w = params[f"conv{fs}_w"]                       # (F, fs, E)
        for k in range(fs):
            conv_w = conv_w.at[k * embedding_dim:(k + 1) * embedding_dim,
                               i * num_filters:(i + 1) * num_filters].set(w[:, k, :].T)
        conv_b = conv_b.at[0, i * num_filters:(i + 1) * num_filters].set(
            params[f"conv{fs}_b"][0])

    fc_w = jnp.zeros((npad, cpad), jnp.float32)
    fc_w = fc_w.at[:total, :num_classes].set(params["fc_w_t"])
    fc_b = jnp.zeros((1, cpad), jnp.float32)
    fc_b = fc_b.at[0, :num_classes].set(params["fc_b"][0])

    return {
        "embedding": params["embedding"],               # (V, E) f32
        "conv_w": conv_w.astype(jnp.bfloat16),          # (K, Npad) bf16
        "conv_b": conv_b,                               # (1, Npad) f32
        "fc_w": fc_w.astype(jnp.bfloat16),              # (Npad, Cpad) bf16
        "fc_b": fc_b,                                   # (1, Cpad) f32
    }


def _build_mask(seq_len, lpad, filter_sizes, num_filters, npad):
    """(Lp, Npad) additive mask: 0 at valid conv positions of each filter-size group.

    Padding lanes (and padded rows) are fully masked; after +bias(=0) and ReLU they
    pool to exactly 0, and the corresponding fc_w rows are zero anyway.
    """
    neg = jnp.float32(-1e30)
    mask = jnp.full((lpad, npad), neg, jnp.float32)
    pos = jnp.arange(lpad)[:, None]
    for i, fs in enumerate(filter_sizes):
        valid = seq_len - fs + 1                        # >= 1 (asserted in wrapper)
        col = jnp.where(pos < valid, 0.0, neg)          # (Lp, 1)
        mask = mask.at[:, i * num_filters:(i + 1) * num_filters].set(
            jnp.broadcast_to(col, (lpad, num_filters)))
    return mask


def textcnn_forward(token_ids, packed, *, filter_sizes, num_filters, num_classes,
                    block_b=None):
    fs_max = max(filter_sizes)
    B, L = token_ids.shape
    E = packed["embedding"].shape[1]
    kdim = packed["conv_w"].shape[0]
    npad = packed["conv_w"].shape[1]
    cpad = packed["fc_w"].shape[1]
    assert kdim == fs_max * E
    assert L >= fs_max, "sequence length must be >= every filter size"

    # Grid=1 for small batches (per-step overhead dominates otherwise).
    # On v7x, pass block_b = Bp // 2 so the parallel batch axis uses both TensorCores.
    if block_b is None:
        block_b = min(_round_up(B, 8), 256)
    Bp = _round_up(B, block_b)
    ids = token_ids
    if Bp != B:
        ids = jnp.concatenate([ids, jnp.zeros((Bp - B, L), ids.dtype)], axis=0)

    # Embedding gather + im2col window build in XLA glue (bf16 activations).
    lpad = _round_up(L, 8)
    emb = jnp.take(packed["embedding"], ids, axis=0).astype(jnp.bfloat16)    # (Bp, L, E)
    emb = jnp.pad(emb, ((0, 0), (0, (lpad - L) + fs_max - 1), (0, 0)))       # (Bp, Lp+fs_max-1, E)
    win = jnp.concatenate([emb[:, k:k + lpad, :] for k in range(fs_max)],
                          axis=-1)                                           # (Bp, Lp, K)

    mask = _build_mask(L, lpad, filter_sizes, num_filters, npad)

    grid = (Bp // block_b,)
    flops = 2 * Bp * lpad * kdim * npad + 2 * Bp * npad * cpad
    bytes_accessed = (win.size * 2 + packed["conv_w"].size * 2
                      + packed["fc_w"].size * 2
                      + (mask.size + packed["conv_b"].size + packed["fc_b"].size) * 4
                      + Bp * cpad * 4)

    out = pl.pallas_call(
        _textcnn_kernel,
        out_shape=jax.ShapeDtypeStruct((Bp, cpad), jnp.float32),
        grid=grid,
        in_specs=[
            pl.BlockSpec((block_b, lpad, kdim), lambda i: (i, 0, 0)),   # windows: tiled on batch
            pl.BlockSpec(packed["conv_w"].shape, lambda i: (0, 0)),     # VMEM-resident weights
            pl.BlockSpec(mask.shape, lambda i: (0, 0)),
            pl.BlockSpec(packed["conv_b"].shape, lambda i: (0, 0)),
            pl.BlockSpec(packed["fc_w"].shape, lambda i: (0, 0)),
            pl.BlockSpec(packed["fc_b"].shape, lambda i: (0, 0)),
        ],
        out_specs=pl.BlockSpec((block_b, cpad), lambda i: (i, 0)),
        compiler_params=pltpu.CompilerParams(
            dimension_semantics=("parallel",)),          # shards across TCs on v7x
        cost_estimate=pl.CostEstimate(flops=flops, transcendentals=0,
                                      bytes_accessed=bytes_accessed),
    )(win, packed["conv_w"], mask, packed["conv_b"], packed["fc_w"], packed["fc_b"])
    return out[:B, :num_classes]


def reference_forward(token_ids, params, *, filter_sizes, num_filters, num_classes):
    """Pure-JAX f32 reference of the PyTorch forward for a correctness check."""
    emb = jnp.take(params["embedding"], token_ids, axis=0).astype(jnp.float32)  # (B, L, E)
    B, L, E = emb.shape
    pooled = []
    for fs in filter_sizes:
        W = params[f"conv{fs}_w"]               # (F, fs, E)
        b = params[f"conv{fs}_b"][0]            # (F,)
        l_out = L - fs + 1
        windows = jnp.stack([emb[:, k:k + l_out, :] for k in range(fs)], axis=2)  # (B,l_out,fs,E)
        conv = jnp.einsum("blke,fke->blf", windows, W) + b[None, None, :]
        conv = jnp.maximum(conv, 0.0)
        pooled.append(jnp.max(conv, axis=1))
    feat = jnp.concatenate(pooled, axis=1)
    return feat @ params["fc_w_t"] + params["fc_b"]


if __name__ == "__main__":
    vocab_size = 50
    embedding_dim = 32
    num_filters = 8
    filter_sizes = (2, 3, 4)       # fs_max * E = 128 -> one lane-dense K=128 matmul
    num_classes = 5
    padding_idx = 0
    batch, seq_len = 64, 16        # default block_b -> single grid step of 64

    key = jax.random.PRNGKey(0)
    k_param, k_tok = jax.random.split(key)
    params = init_params(k_param, vocab_size, embedding_dim, num_filters,
                         filter_sizes, num_classes, padding_idx)
    packed = pack_params(params, filter_sizes=filter_sizes, num_filters=num_filters,
                         embedding_dim=embedding_dim, num_classes=num_classes)
    token_ids = jax.random.randint(k_tok, (batch, seq_len), 0, vocab_size, jnp.int32)

    fwd = jax.jit(functools.partial(textcnn_forward,
                                    filter_sizes=filter_sizes,
                                    num_filters=num_filters,
                                    num_classes=num_classes))
    out = jax.block_until_ready(fwd(token_ids, packed))

    ref = reference_forward(token_ids, params,
                            filter_sizes=filter_sizes,
                            num_filters=num_filters,
                            num_classes=num_classes)
    assert out.shape == (batch, num_classes)
    # bf16 MXU operands (f32 accumulation) vs. pure-f32 reference -> loose-ish tolerance.
    assert jnp.allclose(out, ref, atol=2e-2, rtol=2e-2)
    print("KERNEL_OK")
</pallas_src>

<mosaic_0001>
module attributes {stable_mosaic.version = 11 : i64} {
  func.func @_textcnn_kernel(%arg0: i32, %arg1: memref<64x16x128xbf16, #tpu.memory_space<vmem>>, %arg2: memref<128x128xbf16, #tpu.memory_space<vmem>>, %arg3: memref<16x128xf32, #tpu.memory_space<vmem>>, %arg4: memref<1x128xf32, #tpu.memory_space<vmem>>, %arg5: memref<128x128xbf16, #tpu.memory_space<vmem>>, %arg6: memref<1x128xf32, #tpu.memory_space<vmem>>, %arg7: memref<64x128xf32, #tpu.memory_space<vmem>>) attributes {dimension_semantics = [#tpu.dimension_semantics<parallel>], iteration_bounds = array<i64: 1>, scalar_prefetch = 0 : i64, scratch_operands = 0 : i64, tpu.core_type = #tpu.core_type<tc>, window_params = [{transform_indices = @transform_0, window_bounds = array<i64: 64, 16, 128>}, {pipeline_mode = #tpu.pipeline_mode<synchronous>, transform_indices = @transform_1, window_bounds = array<i64: 128, 128>}, {pipeline_mode = #tpu.pipeline_mode<synchronous>, transform_indices = @transform_2, window_bounds = array<i64: 16, 128>}, {pipeline_mode = #tpu.pipeline_mode<synchronous>, transform_indices = @transform_3, window_bounds = array<i64: 1, 128>}, {pipeline_mode = #tpu.pipeline_mode<synchronous>, transform_indices = @transform_4, window_bounds = array<i64: 128, 128>}, {pipeline_mode = #tpu.pipeline_mode<synchronous>, transform_indices = @transform_5, window_bounds = array<i64: 1, 128>}, {transform_indices = @transform_6, window_bounds = array<i64: 64, 128>}]} {
    %c0 = arith.constant 0 : index
    %c0_0 = arith.constant 0 : index
    %c0_1 = arith.constant 0 : index
    %0 = vector.load %arg1[%c0, %c0_0, %c0_1] : memref<64x16x128xbf16, #tpu.memory_space<vmem>>, vector<64x16x128xbf16>
    %c0_2 = arith.constant 0 : index
    %c0_3 = arith.constant 0 : index
    %1 = vector.load %arg2[%c0_2, %c0_3] : memref<128x128xbf16, #tpu.memory_space<vmem>>, vector<128x128xbf16>
    %cst = arith.constant dense<0.000000e+00> : vector<64x16x128xf32>
    %2 = tpu.matmul %0, %1, %cst {dimension_numbers = #tpu.dot_dimension_numbers<[2], [0], [0, 1], [1], [0, 0, 0, 1, 1, 1], [], []>} : vector<64x16x128xbf16>, vector<128x128xbf16>, vector<64x16x128xf32> -> vector<64x16x128xf32>
    %c0_4 = arith.constant 0 : index
    %c0_5 = arith.constant 0 : index
    %3 = vector.load %arg3[%c0_4, %c0_5] : memref<16x128xf32, #tpu.memory_space<vmem>>, vector<16x128xf32>
    %4 = vector.shape_cast %3 : vector<16x128xf32> to vector<1x16x128xf32>
    %5 = vector.broadcast %4 : vector<1x16x128xf32> to vector<64x16x128xf32>
    %6 = arith.addf %2, %5 : vector<64x16x128xf32>
    %cst_6 = arith.constant dense<0xFF800000> : vector<64x128xf32>
    %7 = vector.multi_reduction <maximumf>, %6, %cst_6 [1] : vector<64x16x128xf32> to vector<64x128xf32>
    %c0_7 = arith.constant 0 : index
    %c0_8 = arith.constant 0 : index
    %8 = vector.load %arg4[%c0_7, %c0_8] : memref<1x128xf32, #tpu.memory_space<vmem>>, vector<1x128xf32>
    %9 = vector.broadcast %8 : vector<1x128xf32> to vector<64x128xf32>
    %10 = arith.addf %7, %9 : vector<64x128xf32>
    %cst_9 = arith.constant 0.000000e+00 : f32
    %11 = vector.broadcast %cst_9 : f32 to vector<64x128xf32>
    %12 = arith.maximumf %10, %11 : vector<64x128xf32>
    %13 = arith.truncf %12 : vector<64x128xf32> to vector<64x128xbf16>
    %c0_10 = arith.constant 0 : index
    %c0_11 = arith.constant 0 : index
    %14 = vector.load %arg5[%c0_10, %c0_11] : memref<128x128xbf16, #tpu.memory_space<vmem>>, vector<128x128xbf16>
    %cst_12 = arith.constant dense<0.000000e+00> : vector<64x128xf32>
    %15 = tpu.matmul %13, %14, %cst_12 {dimension_numbers = #tpu.dot_dimension_numbers<[1], [0], [0], [1], [0, 0, 1, 1], [], []>} : vector<64x128xbf16>, vector<128x128xbf16>, vector<64x128xf32> -> vector<64x128xf32>
    %c0_13 = arith.constant 0 : index
    %c0_14 = arith.constant 0 : index
    %16 = vector.load %arg6[%c0_13, %c0_14] : memref<1x128xf32, #tpu.memory_space<vmem>>, vector<1x128xf32>
    %17 = vector.broadcast %16 : vector<1x128xf32> to vector<64x128xf32>
    %18 = arith.addf %15, %17 : vector<64x128xf32>
    %c0_15 = arith.constant 0 : index
    %c0_16 = arith.constant 0 : index
    %19 = vector.load %arg7[%c0_15, %c0_16] : memref<64x128xf32, #tpu.memory_space<vmem>>, vector<64x128xf32>
    tpu.vector_store %arg7[%c0_15, %c0_16], %18 {strides = array<i32>} : memref<64x128xf32, #tpu.memory_space<vmem>>, vector<64x128xf32>,
    return
  }
  func.func @transform_0(%arg0: i32) -> (i32, i32, i32) {
    %c0_i32 = arith.constant 0 : i32
    %c0_i32_0 = arith.constant 0 : i32
    %c0_i32_1 = arith.constant 0 : i32
    return %arg0, %c0_i32, %c0_i32_0 : i32, i32, i32
  }
  func.func @transform_1(%arg0: i32) -> (i32, i32) {
    %c0_i32 = arith.constant 0 : i32
    %c0_i32_0 = arith.constant 0 : i32
    %c0_i32_1 = arith.constant 0 : i32
    return %c0_i32, %c0_i32_0 : i32, i32
  }
  func.func @transform_2(%arg0: i32) -> (i32, i32) {
    %c0_i32 = arith.constant 0 : i32
    %c0_i32_0 = arith.constant 0 : i32
    %c0_i32_1 = arith.constant 0 : i32
    return %c0_i32, %c0_i32_0 : i32, i32
  }
  func.func @transform_3(%arg0: i32) -> (i32, i32) {
    %c0_i32 = arith.constant 0 : i32
    %c0_i32_0 = arith.constant 0 : i32
    %c0_i32_1 = arith.constant 0 : i32
    return %c0_i32, %c0_i32_0 : i32, i32
  }
  func.func @transform_4(%arg0: i32) -> (i32, i32) {
    %c0_i32 = arith.constant 0 : i32
    %c0_i32_0 = arith.constant 0 : i32
    %c0_i32_1 = arith.constant 0 : i32
    return %c0_i32, %c0_i32_0 : i32, i32
  }
  func.func @transform_5(%arg0: i32) -> (i32, i32) {
    %c0_i32 = arith.constant 0 : i32
    %c0_i32_0 = arith.constant 0 : i32
    %c0_i32_1 = arith.constant 0 : i32
    return %c0_i32, %c0_i32_0 : i32, i32
  }
  func.func @transform_6(%arg0: i32) -> (i32, i32) {
    %c0_i32 = arith.constant 0 : i32
    %c0_i32_0 = arith.constant 0 : i32
    return %arg0, %c0_i32 : i32, i32
  }
}

</mosaic_0001>

<llo_original>
// kernel: textcnn_forward.1
$region0: #{textcnn_forward.1}
  #allocation0 [shape = 'u32[]', space=smem, size = 0x4, offset = 0x4, fixed_abs, tag = 'smem constant byte address 0x4 - core index']
  #allocation1 [shape = 'u32[72,128]{1,0:T(1,128)}', space=vmem, size = 0x9000, scoped, tag = 'internal scratch']
  %s0 = inlined_call_operand.vmem [shape: bf16[64,16,128], index: 0, kind: input, shape index: {}]
  %s1 = inlined_call_operand.vmem [shape: bf16[128,128], index: 1, kind: input, shape index: {}]
  %s2 = inlined_call_operand.vmem [shape: f32[16,128], index: 2, kind: input, shape index: {}]
  %s3 = inlined_call_operand.vmem [shape: f32[1,128], index: 3, kind: input, shape index: {}]
  %s4 = inlined_call_operand.vmem [shape: bf16[128,128], index: 4, kind: input, shape index: {}]
  %s5 = inlined_call_operand.vmem [shape: f32[1,128], index: 5, kind: input, shape index: {}]
  %s6 = inlined_call_operand.vmem [shape: f32[64,128], index: 6, kind: output, shape index: {}]
  %s7 = sld [smem:[#allocation0]]
  $region34: #{textcnn_forward.1} parent=0
    _
  %s9 = ssub.s32 1, %s7
  %s10 = scalar_select 0, %s9, %s7
  // Predicated region
  $region2: #{textcnn_forward.1} parent=0 // pred_check
    _
  $region3: #{textcnn_forward.1} parent=0 // pred_check_branch
    %12 = sbr.rel (0) target = $region5
  $region4: #{textcnn_forward.1} parent=0 // pred_region
    _
  $region5: #{textcnn_forward.1} parent=0 // pred_fallthru
    _
  // Predicated region
  $region6: #{textcnn_forward.1} parent=0 // pred_check
    _
  $region7: #{textcnn_forward.1} parent=0 // pred_check_branch
    %14 = sbr.rel (0) target = $region9
  $region8: #{textcnn_forward.1} parent=0 // pred_region
    _
  $region9: #{textcnn_forward.1} parent=0 // pred_fallthru
    _
  // Predicated region
  $region10: #{textcnn_forward.1} parent=0 // pred_check
    _
  $region11: #{textcnn_forward.1} parent=0 // pred_check_branch
    %16 = sbr.rel (0) target = $region13
  $region12: #{textcnn_forward.1} parent=0 // pred_region
    _
  $region13: #{textcnn_forward.1} parent=0 // pred_fallthru
    _
  // Predicated region
  $region14: #{textcnn_forward.1} parent=0 // pred_check
    _
  $region15: #{textcnn_forward.1} parent=0 // pred_check_branch
    %18 = sbr.rel (0) target = $region17
  $region16: #{textcnn_forward.1} parent=0 // pred_region
    _
  $region17: #{textcnn_forward.1} parent=0 // pred_fallthru
    _
  // Predicated region
  $region18: #{textcnn_forward.1} parent=0 // pred_check
    _
  $region19: #{textcnn_forward.1} parent=0 // pred_check_branch
    %20 = sbr.rel (0) target = $region21
  $region20: #{textcnn_forward.1} parent=0 // pred_region
    _
  $region21: #{textcnn_forward.1} parent=0 // pred_fallthru
    _
  // Predicated region
  $region22: #{textcnn_forward.1} parent=0 // pred_check
    _
  $region23: #{textcnn_forward.1} parent=0 // pred_check_branch
    %22 = sbr.rel (0) target = $region25
  $region24: #{textcnn_forward.1} parent=0 // pred_region
    _
  $region25: #{textcnn_forward.1} parent=0 // pred_fallthru
    _
  %v23 = vld [vmem:[%s0] sm:$0xf]
  %v24 = vld [vmem:[%s0 + $0x4] sm:$0xf]
  %v25 = vld [vmem:[%s0 + $0x8] sm:$0xf]
  %v26 = vld [vmem:[%s0 + $0xc] sm:$0xf]
  %v27 = vld [vmem:[%s0 + $0x10] sm:$0xf]
  %v28 = vld [vmem:[%s0 + $0x14] sm:$0xf]
  %v29 = vld [vmem:[%s0 + $0x18] sm:$0xf]
  %v30 = vld [vmem:[%s0 + $0x1c] sm:$0xf]
  %v31 = vld [vmem:[%s0 + $0x20] sm:$0xf]
  %v32 = vld [vmem:[%s0 + $0x24] sm:$0xf]
  %v33 = vld [vmem:[%s0 + $0x28] sm:$0xf]
  %v34 = vld [vmem:[%s0 + $0x2c] sm:$0xf]
  %v35 = vld [vmem:[%s0 + $0x30] sm:$0xf]
  %v36 = vld [vmem:[%s0 + $0x34] sm:$0xf]
  %v37 = vld [vmem:[%s0 + $0x38] sm:$0xf]
  %v38 = vld [vmem:[%s0 + $0x3c] sm:$0xf]
  %v39 = vld [vmem:[%s0 + $0x40] sm:$0xf]
  %v40 = vld [vmem:[%s0 + $0x44] sm:$0xf]
  %v41 = vld [vmem:[%s0 + $0x48] sm:$0xf]
  %v42 = vld [vmem:[%s0 + $0x4c] sm:$0xf]
  %v43 = vld [vmem:[%s0 + $0x50] sm:$0xf]
  %v44 = vld [vmem:[%s0 + $0x54] sm:$0xf]
  %v45 = vld [vmem:[%s0 + $0x58] sm:$0xf]
  %v46 = vld [vmem:[%s0 + $0x5c] sm:$0xf]
  %v47 = vld [vmem:[%s0 + $0x60] sm:$0xf]
  %v48 = vld [vmem:[%s0 + $0x64] sm:$0xf]
  %v49 = vld [vmem:[%s0 + $0x68] sm:$0xf]
  %v50 = vld [vmem:[%s0 + $0x6c] sm:$0xf]
  %v51 = vld [vmem:[%s0 + $0x70] sm:$0xf]
  %v52 = vld [vmem:[%s0 + $0x74] sm:$0xf]
  %v53 = vld [vmem:[%s0 + $0x78] sm:$0xf]
  %v54 = vld [vmem:[%s0 + $0x7c] sm:$0xf]
  %v55 = vld [vmem:[%s0 + $0x80] sm:$0xf]
  %v56 = vld [vmem:[%s0 + $0x84] sm:$0xf]
  %v57 = vld [vmem:[%s0 + $0x88] sm:$0xf]
  %v58 = vld [vmem:[%s0 + $0x8c] sm:$0xf]
  %v59 = vld [vmem:[%s0 + $0x90] sm:$0xf]
  %v60 = vld [vmem:[%s0 + $0x94] sm:$0xf]
  %v61 = vld [vmem:[%s0 + $0x98] sm:$0xf]
  %v62 = vld [vmem:[%s0 + $0x9c] sm:$0xf]
  %v63 = vld [vmem:[%s0 + $0xa0] sm:$0xf]
  %v64 = vld [vmem:[%s0 + $0xa4] sm:$0xf]
  %v65 = vld [vmem:[%s0 + $0xa8] sm:$0xf]
  %v66 = vld [vmem:[%s0 + $0xac] sm:$0xf]
  %v67 = vld [vmem:[%s0 + $0xb0] sm:$0xf]
  %v68 = vld [vmem:[%s0 + $0xb4] sm:$0xf]
  %v69 = vld [vmem:[%s0 + $0xb8] sm:$0xf]
  %v70 = vld [vmem:[%s0 + $0xbc] sm:$0xf]
  %v71 = vld [vmem:[%s0 + $0xc0] sm:$0xf]
  %v72 = vld [vmem:[%s0 + $0xc4] sm:$0xf]
  %v73 = vld [vmem:[%s0 + $0xc8] sm:$0xf]
  %v74 = vld [vmem:[%s0 + $0xcc] sm:$0xf]
  %v75 = vld [vmem:[%s0 + $0xd0] sm:$0xf]
  %v76 = vld [vmem:[%s0 + $0xd4] sm:$0xf]
  %v77 = vld [vmem:[%s0 + $0xd8] sm:$0xf]
  %v78 = vld [vmem:[%s0 + $0xdc] sm:$0xf]
  %v79 = vld [vmem:[%s0 + $0xe0] sm:$0xf]
  %v80 = vld [vmem:[%s0 + $0xe4] sm:$0xf]
  %v81 = vld [vmem:[%s0 + $0xe8] sm:$0xf]
  %v82 = vld [vmem:[%s0 + $0xec] sm:$0xf]
  %v83 = vld [vmem:[%s0 + $0xf0] sm:$0xf]
  %v84 = vld [vmem:[%s0 + $0xf4] sm:$0xf]
  %v85 = vld [vmem:[%s0 + $0xf8] sm:$0xf]
  %v86 = vld [vmem:[%s0 + $0xfc] sm:$0xf]
  %v87 = vld [vmem:[%s0 + $0x100] sm:$0xf]
  %v88 = vld [vmem:[%s0 + $0x104] sm:$0xf]
  %v89 = vld [vmem:[%s0 + $0x108] sm:$0xf]
  %v90 = vld [vmem:[%s0 + $0x10c] sm:$0xf]
  %v91 = vld [vmem:[%s0 + $0x110] sm:$0xf]
  %v92 = vld [vmem:[%s0 + $0x114] sm:$0xf]
  %v93 = vld [vmem:[%s0 + $0x118] sm:$0xf]
  %v94 = vld [vmem:[%s0 + $0x11c] sm:$0xf]
  %v95 = vld [vmem:[%s0 + $0x120] sm:$0xf]
  %v96 = vld [vmem:[%s0 + $0x124] sm:$0xf]
  %v97 = vld [vmem:[%s0 + $0x128] sm:$0xf]
  %v98 = vld [vmem:[%s0 + $0x12c] sm:$0xf]
  %v99 = vld [vmem:[%s0 + $0x130] sm:$0xf]
  %v100 = vld [vmem:[%s0 + $0x134] sm:$0xf]
  %v101 = vld [vmem:[%s0 + $0x138] sm:$0xf]
  %v102 = vld [vmem:[%s0 + $0x13c] sm:$0xf]
  %v103 = vld [vmem:[%s0 + $0x140] sm:$0xf]
  %v104 = vld [vmem:[%s0 + $0x144] sm:$0xf]
  %v105 = vld [vmem:[%s0 + $0x148] sm:$0xf]
  %v106 = vld [vmem:[%s0 + $0x14c] sm:$0xf]
  %v107 = vld [vmem:[%s0 + $0x150] sm:$0xf]
  %v108 = vld [vmem:[%s0 + $0x154] sm:$0xf]
  %v109 = vld [vmem:[%s0 + $0x158] sm:$0xf]
  %v110 = vld [vmem:[%s0 + $0x15c] sm:$0xf]
  %v111 = vld [vmem:[%s0 + $0x160] sm:$0xf]
  %v112 = vld [vmem:[%s0 + $0x164] sm:$0xf]
  %v113 = vld [vmem:[%s0 + $0x168] sm:$0xf]
  %v114 = vld [vmem:[%s0 + $0x16c] sm:$0xf]
  %v115 = vld [vmem:[%s0 + $0x170] sm:$0xf]
  %v116 = vld [vmem:[%s0 + $0x174] sm:$0xf]
  %v117 = vld [vmem:[%s0 + $0x178] sm:$0xf]
  %v118 = vld [vmem:[%s0 + $0x17c] sm:$0xf]
  %v119 = vld [vmem:[%s0 + $0x180] sm:$0xf]
  %v120 = vld [vmem:[%s0 + $0x184] sm:$0xf]
  %v121 = vld [vmem:[%s0 + $0x188] sm:$0xf]
  %v122 = vld [vmem:[%s0 + $0x18c] sm:$0xf]
  %v123 = vld [vmem:[%s0 + $0x190] sm:$0xf]
  %v124 = vld [vmem:[%s0 + $0x194] sm:$0xf]
  %v125 = vld [vmem:[%s0 + $0x198] sm:$0xf]
  %v126 = vld [vmem:[%s0 + $0x19c] sm:$0xf]
  %v127 = vld [vmem:[%s0 + $0x1a0] sm:$0xf]
  %v128 = vld [vmem:[%s0 + $0x1a4] sm:$0xf]
  %v129 = vld [vmem:[%s0 + $0x1a8] sm:$0xf]
  %v130 = vld [vmem:[%s0 + $0x1ac] sm:$0xf]
  %v131 = vld [vmem:[%s0 + $0x1b0] sm:$0xf]
  %v132 = vld [vmem:[%s0 + $0x1b4] sm:$0xf]
  %v133 = vld [vmem:[%s0 + $0x1b8] sm:$0xf]
  %v134 = vld [vmem:[%s0 + $0x1bc] sm:$0xf]
  %v135 = vld [vmem:[%s0 + $0x1c0] sm:$0xf]
  %v136 = vld [vmem:[%s0 + $0x1c4] sm:$0xf]
  %v137 = vld [vmem:[%s0 + $0x1c8] sm:$0xf]
  %v138 = vld [vmem:[%s0 + $0x1cc] sm:$0xf]
  %v139 = vld [vmem:[%s0 + $0x1d0] sm:$0xf]
  %v140 = vld [vmem:[%s0 + $0x1d4] sm:$0xf]
  %v141 = vld [vmem:[%s0 + $0x1d8] sm:$0xf]
  %v142 = vld [vmem:[%s0 + $0x1dc] sm:$0xf]
  %v143 = vld [vmem:[%s0 + $0x1e0] sm:$0xf]
  %v144 = vld [vmem:[%s0 + $0x1e4] sm:$0xf]
  %v145 = vld [vmem:[%s0 + $0x1e8] sm:$0xf]
  %v146 = vld [vmem:[%s0 + $0x1ec] sm:$0xf]
  %v147 = vld [vmem:[%s0 + $0x1f0] sm:$0xf]
  %v148 = vld [vmem:[%s0 + $0x1f4] sm:$0xf]
  %v149 = vld [vmem:[%s0 + $0x1f8] sm:$0xf]
  %v150 = vld [vmem:[%s0 + $0x1fc] sm:$0xf]
  %v151 = vld [vmem:[%s1] sm:$0xf]
  %v152 = vld [vmem:[%s1 + $0x4] sm:$0xf]
  %v153 = vld [vmem:[%s1 + $0x8] sm:$0xf]
  %v154 = vld [vmem:[%s1 + $0xc] sm:$0xf]
  %v155 = vld [vmem:[%s1 + $0x10] sm:$0xf]
  %v156 = vld [vmem:[%s1 + $0x14] sm:$0xf]
  %v157 = vld [vmem:[%s1 + $0x18] sm:$0xf]
  %v158 = vld [vmem:[%s1 + $0x1c] sm:$0xf]
  %v159 = vld [vmem:[%s1 + $0x20] sm:$0xf]
  %v160 = vld [vmem:[%s1 + $0x24] sm:$0xf]
  %v161 = vld [vmem:[%s1 + $0x28] sm:$0xf]
  %v162 = vld [vmem:[%s1 + $0x2c] sm:$0xf]
  %v163 = vld [vmem:[%s1 + $0x30] sm:$0xf]
  %v164 = vld [vmem:[%s1 + $0x34] sm:$0xf]
  %v165 = vld [vmem:[%s1 + $0x38] sm:$0xf]
  %v166 = vld [vmem:[%s1 + $0x3c] sm:$0xf]
  %v167 = vld [vmem:[%s2] sm:$0xff]
  %v168 = vld [vmem:[%s2 + $0x8] sm:$0xff]
  %v297 = vunpack.c.l.b16 %v23
  %v298 = vunpack.c.l.b16 %v24
  %v299 = vunpack.c.l.b16 %v25
  %v300 = vunpack.c.l.b16 %v26
  %v301 = vunpack.c.l.b16 %v27
  %v302 = vunpack.c.l.b16 %v28
  %v303 = vunpack.c.l.b16 %v29
  %v304 = vunpack.c.l.b16 %v30
  %v305 = vunpack.c.l.b16 %v31
  %v306 = vunpack.c.l.b16 %v32
  %v307 = vunpack.c.l.b16 %v33
  %v308 = vunpack.c.l.b16 %v34
  %v309 = vunpack.c.l.b16 %v35
  %v310 = vunpack.c.l.b16 %v36
  %v311 = vunpack.c.l.b16 %v37
  %v312 = vunpack.c.l.b16 %v38
  %v313 = vunpack.c.l.b16 %v39
  %v314 = vunpack.c.l.b16 %v40
  %v315 = vunpack.c.l.b16 %v41
  %v316 = vunpack.c.l.b16 %v42
  %v317 = vunpack.c.l.b16 %v43
  %v318 = vunpack.c.l.b16 %v44
  %v319 = vunpack.c.l.b16 %v45
  %v320 = vunpack.c.l.b16 %v46
  %v321 = vunpack.c.l.b16 %v47
  %v322 = vunpack.c.l.b16 %v48
  %v323 = vunpack.c.l.b16 %v49
  %v324 = vunpack.c.l.b16 %v50
  %v325 = vunpack.c.l.b16 %v51
  %v326 = vunpack.c.l.b16 %v52
  %v327 = vunpack.c.l.b16 %v53
  %v328 = vunpack.c.l.b16 %v54
  %v329 = vunpack.c.l.b16 %v55
  %v330 = vunpack.c.l.b16 %v56
  %v331 = vunpack.c.l.b16 %v57
  %v332 = vunpack.c.l.b16 %v58
  %v333 = vunpack.c.l.b16 %v59
  %v334 = vunpack.c.l.b16 %v60
  %v335 = vunpack.c.l.b16 %v61
  %v336 = vunpack.c.l.b16 %v62
  %v337 = vunpack.c.l.b16 %v63
  %v338 = vunpack.c.l.b16 %v64
  %v339 = vunpack.c.l.b16 %v65
  %v340 = vunpack.c.l.b16 %v66
  %v341 = vunpack.c.l.b16 %v67
  %v342 = vunpack.c.l.b16 %v68
  %v343 = vunpack.c.l.b16 %v69
  %v344 = vunpack.c.l.b16 %v70
  %v345 = vunpack.c.l.b16 %v71
  %v346 = vunpack.c.l.b16 %v72
  %v347 = vunpack.c.l.b16 %v73
  %v348 = vunpack.c.l.b16 %v74
  %v349 = vunpack.c.l.b16 %v75
  %v350 = vunpack.c.l.b16 %v76
  %v351 = vunpack.c.l.b16 %v77
  %v352 = vunpack.c.l.b16 %v78
  %v353 = vunpack.c.l.b16 %v79
  %v354 = vunpack.c.l.b16 %v80
  %v355 = vunpack.c.l.b16 %v81
  %v356 = vunpack.c.l.b16 %v82
  %v357 = vunpack.c.l.b16 %v83
  %v358 = vunpack.c.l.b16 %v84
  %v359 = vunpack.c.l.b16 %v85
  %v360 = vunpack.c.l.b16 %v86
  %v361 = vunpack.c.l.b16 %v87
  %v362 = vunpack.c.l.b16 %v88
  %v363 = vunpack.c.l.b16 %v89
  %v364 = vunpack.c.l.b16 %v90
  %v365 = vunpack.c.l.b16 %v91
  %v366 = vunpack.c.l.b16 %v92
  %v367 = vunpack.c.l.b16 %v93
  %v368 = vunpack.c.l.b16 %v94
  %v369 = vunpack.c.l.b16 %v95
  %v370 = vunpack.c.l.b16 %v96
  %v371 = vunpack.c.l.b16 %v97
  %v372 = vunpack.c.l.b16 %v98
  %v373 = vunpack.c.l.b16 %v99
  %v374 = vunpack.c.l.b16 %v100
  %v375 = vunpack.c.l.b16 %v101
  %v376 = vunpack.c.l.b16 %v102
  %v377 = vunpack.c.l.b16 %v103
  %v378 = vunpack.c.l.b16 %v104
  %v379 = vunpack.c.l.b16 %v105
  %v380 = vunpack.c.l.b16 %v106
  %v381 = vunpack.c.l.b16 %v107
  %v382 = vunpack.c.l.b16 %v108
  %v383 = vunpack.c.l.b16 %v109
  %v384 = vunpack.c.l.b16 %v110
  %v385 = vunpack.c.l.b16 %v111
  %v386 = vunpack.c.l.b16 %v112
  %v387 = vunpack.c.l.b16 %v113
  %v388 = vunpack.c.l.b16 %v114
  %v389 = vunpack.c.l.b16 %v115
  %v390 = vunpack.c.l.b16 %v116
  %v391 = vunpack.c.l.b16 %v117
  %v392 = vunpack.c.l.b16 %v118
  %v393 = vunpack.c.l.b16 %v119
  %v394 = vunpack.c.l.b16 %v120
  %v395 = vunpack.c.l.b16 %v121
  %v396 = vunpack.c.l.b16 %v122
  %v397 = vunpack.c.l.b16 %v123
  %v398 = vunpack.c.l.b16 %v124
  %v399 = vunpack.c.l.b16 %v125
  %v400 = vunpack.c.l.b16 %v126
  %v401 = vunpack.c.l.b16 %v127
  %v402 = vunpack.c.l.b16 %v128
  %v403 = vunpack.c.l.b16 %v129
  %v404 = vunpack.c.l.b16 %v130
  %v405 = vunpack.c.l.b16 %v131
  %v406 = vunpack.c.l.b16 %v132
  %v407 = vunpack.c.l.b16 %v133
  %v408 = vunpack.c.l.b16 %v134
  %v409 = vunpack.c.l.b16 %v135
  %v410 = vunpack.c.l.b16 %v136
  %v411 = vunpack.c.l.b16 %v137
  %v412 = vunpack.c.l.b16 %v138
  %v413 = vunpack.c.l.b16 %v139
  %v414 = vunpack.c.l.b16 %v140
  %v415 = vunpack.c.l.b16 %v141
  %v416 = vunpack.c.l.b16 %v142
  %v417 = vunpack.c.l.b16 %v143
  %v418 = vunpack.c.l.b16 %v144
  %v419 = vunpack.c.l.b16 %v145
  %v420 = vunpack.c.l.b16 %v146
  %v421 = vunpack.c.l.b16 %v147
  %v422 = vunpack.c.l.b16 %v148
  %v423 = vunpack.c.l.b16 %v149
  %v424 = vunpack.c.l.b16 %v150
  %v425 = vpack.c.b16 %v298, %v297
  %v426 = vpack.c.b16 %v300, %v299
  %v427 = vpack.c.b16 %v302, %v301
  %v428 = vpack.c.b16 %v304, %v303
  %v429 = vpack.c.b16 %v306, %v305
  %v430 = vpack.c.b16 %v308, %v307
  %v431 = vpack.c.b16 %v310, %v309
  %v432 = vpack.c.b16 %v312, %v311
  %v433 = vpack.c.b16 %v314, %v313
  %v434 = vpack.c.b16 %v316, %v315
  %v435 = vpack.c.b16 %v318, %v317
  %v436 = vpack.c.b16 %v320, %v319
  %v437 = vpack.c.b16 %v322, %v321
  %v438 = vpack.c.b16 %v324, %v323
  %v439 = vpack.c.b16 %v326, %v325
  %v440 = vpack.c.b16 %v328, %v327
  %v441 = vpack.c.b16 %v330, %v329
  %v442 = vpack.c.b16 %v332, %v331
  %v443 = vpack.c.b16 %v334, %v333
  %v444 = vpack.c.b16 %v336, %v335
  %v445 = vpack.c.b16 %v338, %v337
  %v446 = vpack.c.b16 %v340, %v339
  %v447 = vpack.c.b16 %v342, %v341
  %v448 = vpack.c.b16 %v344, %v343
  %v449 = vpack.c.b16 %v346, %v345
  %v450 = vpack.c.b16 %v348, %v347
  %v451 = vpack.c.b16 %v350, %v349
  %v452 = vpack.c.b16 %v352, %v351
  %v453 = vpack.c.b16 %v354, %v353
  %v454 = vpack.c.b16 %v356, %v355
  %v455 = vpack.c.b16 %v358, %v357
  %v456 = vpack.c.b16 %v360, %v359
  %v457 = vpack.c.b16 %v362, %v361
  %v458 = vpack.c.b16 %v364, %v363
  %v459 = vpack.c.b16 %v366, %v365
  %v460 = vpack.c.b16 %v368, %v367
  %v461 = vpack.c.b16 %v370, %v369
  %v462 = vpack.c.b16 %v372, %v371
  %v463 = vpack.c.b16 %v374, %v373
  %v464 = vpack.c.b16 %v376, %v375
  %v465 = vpack.c.b16 %v378, %v377
  %v466 = vpack.c.b16 %v380, %v379
  %v467 = vpack.c.b16 %v382, %v381
  %v468 = vpack.c.b16 %v384, %v383
  %v469 = vpack.c.b16 %v386, %v385
  %v470 = vpack.c.b16 %v388, %v387
  %v471 = vpack.c.b16 %v390, %v389
  %v472 = vpack.c.b16 %v392, %v391
  %v473 = vpack.c.b16 %v394, %v393
  %v474 = vpack.c.b16 %v396, %v395
  %v475 = vpack.c.b16 %v398, %v397
  %v476 = vpack.c.b16 %v400, %v399
  %v477 = vpack.c.b16 %v402, %v401
  %v478 = vpack.c.b16 %v404, %v403
  %v479 = vpack.c.b16 %v406, %v405
  %v480 = vpack.c.b16 %v408, %v407
  %v481 = vpack.c.b16 %v410, %v409
  %v482 = vpack.c.b16 %v412, %v411
  %v483 = vpack.c.b16 %v414, %v413
  %v484 = vpack.c.b16 %v416, %v415
  %v485 = vpack.c.b16 %v418, %v417
  %v486 = vpack.c.b16 %v420, %v419
  %v487 = vpack.c.b16 %v422, %v421
  %v488 = vpack.c.b16 %v424, %v423
  %v569 = vunpack.c.l.b16 %v151
  %v570 = vunpack.c.l.b16 %v152
  %v571 = vunpack.c.l.b16 %v153
  %v572 = vunpack.c.l.b16 %v154
  %v573 = vunpack.c.l.b16 %v155
  %v574 = vunpack.c.l.b16 %v156
  %v575 = vunpack.c.l.b16 %v157
  %v576 = vunpack.c.l.b16 %v158
  %v577 = vunpack.c.l.b16 %v159
  %v578 = vunpack.c.l.b16 %v160
  %v579 = vunpack.c.l.b16 %v161
  %v580 = vunpack.c.l.b16 %v162
  %v581 = vunpack.c.l.b16 %v163
  %v582 = vunpack.c.l.b16 %v164
  %v583 = vunpack.c.l.b16 %v165
  %v584 = vunpack.c.l.b16 %v166
  %v585 = vpack.c.b16 %v570, %v569
  %v586 = vpack.c.b16 %v572, %v571
  %v587 = vpack.c.b16 %v574, %v573
  %v588 = vpack.c.b16 %v576, %v575
  %v589 = vpack.c.b16 %v578, %v577
  %v590 = vpack.c.b16 %v580, %v579
  %v591 = vpack.c.b16 %v582, %v581
  %v592 = vpack.c.b16 %v584, %v583
  %601 = vmatpush.bf16.msra.mxu0 %v592
  %602 = vmatpush.bf16.msra.mxu0 %v591
  %603 = vmatpush.bf16.msra.mxu0 %v590
  %604 = vmatpush.bf16.msra.mxu0 %v589
  %605 = vmatpush.bf16.msra.mxu0 %v588
  %606 = vmatpush.bf16.msra.mxu0 %v587
  %607 = vmatpush.bf16.msra.mxu0 %v586
  %608 = vmatpush.bf16.msra.mxu0 %v585
  %609 = vmatmul.bf16.gmra.mxu0 %v425
  %v610 = vpop.f32.mrf.mxu0
  %v611 = vadd.f32 %v167, %v610
  %v612 = vpop.f32.mrf.mxu0
  %v613 = vadd.f32 %v168, %v612
  %614 = vmatmul.bf16.gmra.mxu0 %v426
  %v615 = vpop.f32.mrf.mxu0
  %v616 = vadd.f32 %v167, %v615
  %v617 = vpop.f32.mrf.mxu0
  %v618 = vadd.f32 %v168, %v617
  %619 = vmatmul.bf16.gmra.mxu0 %v427
  %v620 = vpop.f32.mrf.mxu0
  %v621 = vadd.f32 %v167, %v620
  %v622 = vpop.f32.mrf.mxu0
  %v623 = vadd.f32 %v168, %v622
  %624 = vmatmul.bf16.gmra.mxu0 %v428
  %v625 = vpop.f32.mrf.mxu0
  %v626 = vadd.f32 %v167, %v625
  %v627 = vpop.f32.mrf.mxu0
  %v628 = vadd.f32 %v168, %v627
  %629 = vmatmul.bf16.gmra.mxu0 %v429
  %v630 = vpop.f32.mrf.mxu0
  %v631 = vadd.f32 %v167, %v630
  %v632 = vpop.f32.mrf.mxu0
  %v633 = vadd.f32 %v168, %v632
  %634 = vmatmul.bf16.gmra.mxu0 %v430
  %v635 = vpop.f32.mrf.mxu0
  %v636 = vadd.f32 %v167, %v635
  %v637 = vpop.f32.mrf.mxu0
  %v638 = vadd.f32 %v168, %v637
  %639 = vmatmul.bf16.gmra.mxu0 %v431
  %v640 = vpop.f32.mrf.mxu0
  %v641 = vadd.f32 %v167, %v640
  %v642 = vpop.f32.mrf.mxu0
  %v643 = vadd.f32 %v168, %v642
  %644 = vmatmul.bf16.gmra.mxu0 %v432
  %v645 = vpop.f32.mrf.mxu0
  %v646 = vadd.f32 %v167, %v645
  %v647 = vpop.f32.mrf.mxu0
  %v648 = vadd.f32 %v168, %v647
  %649 = vmatmul.bf16.gmra.mxu0 %v433
  %v650 = vpop.f32.mrf.mxu0
  %v651 = vadd.f32 %v167, %v650
  %v652 = vpop.f32.mrf.mxu0
  %v653 = vadd.f32 %v168, %v652
  %654 = vmatmul.bf16.gmra.mxu0 %v434
  %v655 = vpop.f32.mrf.mxu0
  %v656 = vadd.f32 %v167, %v655
  %v657 = vpop.f32.mrf.mxu0
  %v658 = vadd.f32 %v168, %v657
  %659 = vmatmul.bf16.gmra.mxu0 %v435
  %v660 = vpop.f32.mrf.mxu0
  %v661 = vadd.f32 %v167, %v660
  %v662 = vpop.f32.mrf.mxu0
  %v663 = vadd.f32 %v168, %v662
  %664 = vmatmul.bf16.gmra.mxu0 %v436
  %v665 = vpop.f32.mrf.mxu0
  %v666 = vadd.f32 %v167, %v665
  %v667 = vpop.f32.mrf.mxu0
  %v668 = vadd.f32 %v168, %v667
  %669 = vmatmul.bf16.gmra.mxu0 %v437
  %v670 = vpop.f32.mrf.mxu0
  %v671 = vadd.f32 %v167, %v670
  %v672 = vpop.f32.mrf.mxu0
  %v673 = vadd.f32 %v168, %v672
  %674 = vmatmul.bf16.gmra.mxu0 %v438
  %v675 = vpop.f32.mrf.mxu0
  %v676 = vadd.f32 %v167, %v675
  %v677 = vpop.f32.mrf.mxu0
  %v678 = vadd.f32 %v168, %v677
  %679 = vmatmul.bf16.gmra.mxu0 %v439
  %v680 = vpop.f32.mrf.mxu0
  %v681 = vadd.f32 %v167, %v680
  %v682 = vpop.f32.mrf.mxu0
  %v683 = vadd.f32 %v168, %v682
  %684 = vmatmul.bf16.gmra.mxu0 %v440
  %v685 = vpop.f32.mrf.mxu0
  %v686 = vadd.f32 %v167, %v685
  %v687 = vpop.f32.mrf.mxu0
  %v688 = vadd.f32 %v168, %v687
  %689 = vmatmul.bf16.gmra.mxu0 %v441
  %v690 = vpop.f32.mrf.mxu0
  %v691 = vadd.f32 %v167, %v690
  %v692 = vpop.f32.mrf.mxu0
  %v693 = vadd.f32 %v168, %v692
  %694 = vmatmul.bf16.gmra.mxu0 %v442
  %v695 = vpop.f32.mrf.mxu0
  %v696 = vadd.f32 %v167, %v695
  %v697 = vpop.f32.mrf.mxu0
  %v698 = vadd.f32 %v168, %v697
  %699 = vmatmul.bf16.gmra.mxu0 %v443
  %v700 = vpop.f32.mrf.mxu0
  %v701 = vadd.f32 %v167, %v700
  %v702 = vpop.f32.mrf.mxu0
  %v703 = vadd.f32 %v168, %v702
  %704 = vmatmul.bf16.gmra.mxu0 %v444
  %v705 = vpop.f32.mrf.mxu0
  %v706 = vadd.f32 %v167, %v705
  %v707 = vpop.f32.mrf.mxu0
  %v708 = vadd.f32 %v168, %v707
  %709 = vmatmul.bf16.gmra.mxu0 %v445
  %v710 = vpop.f32.mrf.mxu0
  %v711 = vadd.f32 %v167, %v710
  %v712 = vpop.f32.mrf.mxu0
  %v713 = vadd.f32 %v168, %v712
  %714 = vmatmul.bf16.gmra.mxu0 %v446
  %v715 = vpop.f32.mrf.mxu0
  %v716 = vadd.f32 %v167, %v715
  %v717 = vpop.f32.mrf.mxu0
  %v718 = vadd.f32 %v168, %v717
  %719 = vmatmul.bf16.gmra.mxu0 %v447
  %v720 = vpop.f32.mrf.mxu0
  %v721 = vadd.f32 %v167, %v720
  %v722 = vpop.f32.mrf.mxu0
  %v723 = vadd.f32 %v168, %v722
  %724 = vmatmul.bf16.gmra.mxu0 %v448
  %v725 = vpop.f32.mrf.mxu0
  %v726 = vadd.f32 %v167, %v725
  %v727 = vpop.f32.mrf.mxu0
  %v728 = vadd.f32 %v168, %v727
  %729 = vmatmul.bf16.gmra.mxu0 %v449
  %v730 = vpop.f32.mrf.mxu0
  %v731 = vadd.f32 %v167, %v730
  %v732 = vpop.f32.mrf.mxu0
  %v733 = vadd.f32 %v168, %v732
  %734 = vmatmul.bf16.gmra.mxu0 %v450
  %v735 = vpop.f32.mrf.mxu0
  %v736 = vadd.f32 %v167, %v735
  %v737 = vpop.f32.mrf.mxu0
  %v738 = vadd.f32 %v168, %v737
  %739 = vmatmul.bf16.gmra.mxu0 %v451
  %v740 = vpop.f32.mrf.mxu0
  %v741 = vadd.f32 %v167, %v740
  %v742 = vpop.f32.mrf.mxu0
  %v743 = vadd.f32 %v168, %v742
  %744 = vmatmul.bf16.gmra.mxu0 %v452
  %v745 = vpop.f32.mrf.mxu0
  %v746 = vadd.f32 %v167, %v745
  %v747 = vpop.f32.mrf.mxu0
  %v748 = vadd.f32 %v168, %v747
  %749 = vmatmul.bf16.gmra.mxu0 %v453
  %v750 = vpop.f32.mrf.mxu0
  %v751 = vadd.f32 %v167, %v750
  %v752 = vpop.f32.mrf.mxu0
  %v753 = vadd.f32 %v168, %v752
  %754 = vmatmul.bf16.gmra.mxu0 %v454
  %v755 = vpop.f32.mrf.mxu0
  %v756 = vadd.f32 %v167, %v755
  %v757 = vpop.f32.mrf.mxu0
  %v758 = vadd.f32 %v168, %v757
  %759 = vmatmul.bf16.gmra.mxu0 %v455
  %v760 = vpop.f32.mrf.mxu0
  %v761 = vadd.f32 %v167, %v760
  %v762 = vpop.f32.mrf.mxu0
  %v763 = vadd.f32 %v168, %v762
  %764 = vmatmul.bf16.gmra.mxu0 %v456
  %v765 = vpop.f32.mrf.mxu0
  %v766 = vadd.f32 %v167, %v765
  %v767 = vpop.f32.mrf.mxu0
  %v768 = vadd.f32 %v168, %v767
  %769 = vmatmul.bf16.gmra.mxu0 %v457
  %v770 = vpop.f32.mrf.mxu0
  %v771 = vadd.f32 %v167, %v770
  %v772 = vpop.f32.mrf.mxu0
  %v773 = vadd.f32 %v168, %v772
  %774 = vmatmul.bf16.gmra.mxu0 %v458
  %v775 = vpop.f32.mrf.mxu0
  %v776 = vadd.f32 %v167, %v775
  %v777 = vpop.f32.mrf.mxu0
  %v778 = vadd.f32 %v168, %v777
  %779 = vmatmul.bf16.gmra.mxu0 %v459
  %v780 = vpop.f32.mrf.mxu0
  %v781 = vadd.f32 %v167, %v780
  %v782 = vpop.f32.mrf.mxu0
  %v783 = vadd.f32 %v168, %v782
  %784 = vmatmul.bf16.gmra.mxu0 %v460
  %v785 = vpop.f32.mrf.mxu0
  %v786 = vadd.f32 %v167, %v785
  %v787 = vpop.f32.mrf.mxu0
  %v788 = vadd.f32 %v168, %v787
  %789 = vmatmul.bf16.gmra.mxu0 %v461
  %v790 = vpop.f32.mrf.mxu0
  %v791 = vadd.f32 %v167, %v790
  %v792 = vpop.f32.mrf.mxu0
  %v793 = vadd.f32 %v168, %v792
  %794 = vmatmul.bf16.gmra.mxu0 %v462
  %v795 = vpop.f32.mrf.mxu0
  %v796 = vadd.f32 %v167, %v795
  %v797 = vpop.f32.mrf.mxu0
  %v798 = vadd.f32 %v168, %v797
  %799 = vmatmul.bf16.gmra.mxu0 %v463
  %v800 = vpop.f32.mrf.mxu0
  %v801 = vadd.f32 %v167, %v800
  %v802 = vpop.f32.mrf.mxu0
  %v803 = vadd.f32 %v168, %v802
  %804 = vmatmul.bf16.gmra.mxu0 %v464
  %v805 = vpop.f32.mrf.mxu0
  %v806 = vadd.f32 %v167, %v805
  %v807 = vpop.f32.mrf.mxu0
  %v808 = vadd.f32 %v168, %v807
  %809 = vmatmul.bf16.gmra.mxu0 %v465
  %v810 = vpop.f32.mrf.mxu0
  %v811 = vadd.f32 %v167, %v810
  %v812 = vpop.f32.mrf.mxu0
  %v813 = vadd.f32 %v168, %v812
  %814 = vmatmul.bf16.gmra.mxu0 %v466
  %v815 = vpop.f32.mrf.mxu0
  %v816 = vadd.f32 %v167, %v815
  %v817 = vpop.f32.mrf.mxu0
  %v818 = vadd.f32 %v168, %v817
  %819 = vmatmul.bf16.gmra.mxu0 %v467
  %v820 = vpop.f32.mrf.mxu0
  %v821 = vadd.f32 %v167, %v820
  %v822 = vpop.f32.mrf.mxu0
  %v823 = vadd.f32 %v168, %v822
  %824 = vmatmul.bf16.gmra.mxu0 %v468
  %v825 = vpop.f32.mrf.mxu0
  %v826 = vadd.f32 %v167, %v825
  %v827 = vpop.f32.mrf.mxu0
  %v828 = vadd.f32 %v168, %v827
  %829 = vmatmul.bf16.gmra.mxu0 %v469
  %v830 = vpop.f32.mrf.mxu0
  %v831 = vadd.f32 %v167, %v830
  %v832 = vpop.f32.mrf.mxu0
  %v833 = vadd.f32 %v168, %v832
  %834 = vmatmul.bf16.gmra.mxu0 %v470
  %v835 = vpop.f32.mrf.mxu0
  %v836 = vadd.f32 %v167, %v835
  %v837 = vpop.f32.mrf.mxu0
  %v838 = vadd.f32 %v168, %v837
  %839 = vmatmul.bf16.gmra.mxu0 %v471
  %v840 = vpop.f32.mrf.mxu0
  %v841 = vadd.f32 %v167, %v840
  %v842 = vpop.f32.mrf.mxu0
  %v843 = vadd.f32 %v168, %v842
  %844 = vmatmul.bf16.gmra.mxu0 %v472
  %v845 = vpop.f32.mrf.mxu0
  %v846 = vadd.f32 %v167, %v845
  %v847 = vpop.f32.mrf.mxu0
  %v848 = vadd.f32 %v168, %v847
  %849 = vmatmul.bf16.gmra.mxu0 %v473
  %v850 = vpop.f32.mrf.mxu0
  %v851 = vadd.f32 %v167, %v850
  %v852 = vpop.f32.mrf.mxu0
  %v853 = vadd.f32 %v168, %v852
  %854 = vmatmul.bf16.gmra.mxu0 %v474
  %v855 = vpop.f32.mrf.mxu0
  %v856 = vadd.f32 %v167, %v855
  %v857 = vpop.f32.mrf.mxu0
  %v858 = vadd.f32 %v168, %v857
  %859 = vmatmul.bf16.gmra.mxu0 %v475
  %v860 = vpop.f32.mrf.mxu0
  %v861 = vadd.f32 %v167, %v860
  %v862 = vpop.f32.mrf.mxu0
  %v863 = vadd.f32 %v168, %v862
  %864 = vmatmul.bf16.gmra.mxu0 %v476
  %v865 = vpop.f32.mrf.mxu0
  %v866 = vadd.f32 %v167, %v865
  %v867 = vpop.f32.mrf.mxu0
  %v868 = vadd.f32 %v168, %v867
  %869 = vmatmul.bf16.gmra.mxu0 %v477
  %v870 = vpop.f32.mrf.mxu0
  %v871 = vadd.f32 %v167, %v870
  %v872 = vpop.f32.mrf.mxu0
  %v873 = vadd.f32 %v168, %v872
  %874 = vmatmul.bf16.gmra.mxu0 %v478
  %v875 = vpop.f32.mrf.mxu0
  %v876 = vadd.f32 %v167, %v875
  %v877 = vpop.f32.mrf.mxu0
  %v878 = vadd.f32 %v168, %v877
  %879 = vmatmul.bf16.gmra.mxu0 %v479
  %v880 = vpop.f32.mrf.mxu0
  %v881 = vadd.f32 %v167, %v880
  %v882 = vpop.f32.mrf.mxu0
  %v883 = vadd.f32 %v168, %v882
  %884 = vmatmul.bf16.gmra.mxu0 %v480
  %v885 = vpop.f32.mrf.mxu0
  %v886 = vadd.f32 %v167, %v885
  %v887 = vpop.f32.mrf.mxu0
  %v888 = vadd.f32 %v168, %v887
  %889 = vmatmul.bf16.gmra.mxu0 %v481
  %v890 = vpop.f32.mrf.mxu0
  %v891 = vadd.f32 %v167, %v890
  %v892 = vpop.f32.mrf.mxu0
  %v893 = vadd.f32 %v168, %v892
  %894 = vmatmul.bf16.gmra.mxu0 %v482
  %v895 = vpop.f32.mrf.mxu0
  %v896 = vadd.f32 %v167, %v895
  %v897 = vpop.f32.mrf.mxu0
  %v898 = vadd.f32 %v168, %v897
  %899 = vmatmul.bf16.gmra.mxu0 %v483
  %v900 = vpop.f32.mrf.mxu0
  %v901 = vadd.f32 %v167, %v900
  %v902 = vpop.f32.mrf.mxu0
  %v903 = vadd.f32 %v168, %v902
  %904 = vmatmul.bf16.gmra.mxu0 %v484
  %v905 = vpop.f32.mrf.mxu0
  %v906 = vadd.f32 %v167, %v905
  %v907 = vpop.f32.mrf.mxu0
  %v908 = vadd.f32 %v168, %v907
  %909 = vmatmul.bf16.gmra.mxu0 %v485
  %v910 = vpop.f32.mrf.mxu0
  %v911 = vadd.f32 %v167, %v910
  %v912 = vpop.f32.mrf.mxu0
  %v913 = vadd.f32 %v168, %v912
  %914 = vmatmul.bf16.gmra.mxu0 %v486
  %v915 = vpop.f32.mrf.mxu0
  %v916 = vadd.f32 %v167, %v915
  %v917 = vpop.f32.mrf.mxu0
  %v918 = vadd.f32 %v168, %v917
  %919 = vmatmul.bf16.gmra.mxu0 %v487
  %v920 = vpop.f32.mrf.mxu0
  %v921 = vadd.f32 %v167, %v920
  %v922 = vpop.f32.mrf.mxu0
  %v923 = vadd.f32 %v168, %v922
  %924 = vmatmul.bf16.gmra.mxu0 %v488
  %v925 = vpop.f32.mrf.mxu0
  %v926 = vadd.f32 %v167, %v925
  %v927 = vpop.f32.mrf.mxu0
  %v928 = vadd.f32 %v168, %v927
  %929 = vdwg.mxu0
  %v930 = vmax.f32 %v611, %v613
  %v931 = vrot.slane %v930, 4
  %v932 = vmax.f32 %v930, %v931
  %v933 = vrot.slane %v932, 2
  %v934 = vmax.f32 %v932, %v933
  %v935 = vrot.slane %v934, 1
  %v936 = vmax.f32 %v934, %v935
  %v937 = vmax.f32 %v616, %v618
  %v938 = vrot.slane %v937, 4
  %v939 = vmax.f32 %v937, %v938
  %v940 = vrot.slane %v939, 2
  %v941 = vmax.f32 %v939, %v940
  %v942 = vrot.slane %v941, 1
  %v943 = vmax.f32 %v941, %v942
  %v944 = vmax.f32 %v621, %v623
  %v945 = vrot.slane %v944, 4
  %v946 = vmax.f32 %v944, %v945
  %v947 = vrot.slane %v946, 2
  %v948 = vmax.f32 %v946, %v947
  %v949 = vrot.slane %v948, 1
  %v950 = vmax.f32 %v948, %v949
  %v951 = vmax.f32 %v626, %v628
  %v952 = vrot.slane %v951, 4
  %v953 = vmax.f32 %v951, %v952
  %v954 = vrot.slane %v953, 2
  %v955 = vmax.f32 %v953, %v954
  %v956 = vrot.slane %v955, 1
  %v957 = vmax.f32 %v955, %v956
  %v958 = vmax.f32 %v631, %v633
  %v959 = vrot.slane %v958, 4
  %v960 = vmax.f32 %v958, %v959
  %v961 = vrot.slane %v960, 2
  %v962 = vmax.f32 %v960, %v961
  %v963 = vrot.slane %v962, 1
  %v964 = vmax.f32 %v962, %v963
  %v965 = vmax.f32 %v636, %v638
  %v966 = vrot.slane %v965, 4
  %v967 = vmax.f32 %v965, %v966
  %v968 = vrot.slane %v967, 2
  %v969 = vmax.f32 %v967, %v968
  %v970 = vrot.slane %v969, 1
  %v971 = vmax.f32 %v969, %v970
  %v972 = vmax.f32 %v641, %v643
  %v973 = vrot.slane %v972, 4
  %v974 = vmax.f32 %v972, %v973
  %v975 = vrot.slane %v974, 2
  %v976 = vmax.f32 %v974, %v975
  %v977 = vrot.slane %v976, 1
  %v978 = vmax.f32 %v976, %v977
  %v979 = vmax.f32 %v646, %v648
  %v980 = vrot.slane %v979, 4
  %v981 = vmax.f32 %v979, %v980
  %v982 = vrot.slane %v981, 2
  %v983 = vmax.f32 %v981, %v982
  %v984 = vrot.slane %v983, 1
  %v985 = vmax.f32 %v983, %v984
  %v986 = vmax.f32 %v651, %v653
  %v987 = vrot.slane %v986, 4
  %v988 = vmax.f32 %v986, %v987
  %v989 = vrot.slane %v988, 2
  %v990 = vmax.f32 %v988, %v989
  %v991 = vrot.slane %v990, 1
  %v992 = vmax.f32 %v990, %v991
  %v993 = vmax.f32 %v656, %v658
  %v994 = vrot.slane %v993, 4
  %v995 = vmax.f32 %v993, %v994
  %v996 = vrot.slane %v995, 2
  %v997 = vmax.f32 %v995, %v996
  %v998 = vrot.slane %v997, 1
  %v999 = vmax.f32 %v997, %v998
  %v1000 = vmax.f32 %v661, %v663
  %v1001 = vrot.slane %v1000, 4
  %v1002 = vmax.f32 %v1000, %v1001
  %v1003 = vrot.slane %v1002, 2
  %v1004 = vmax.f32 %v1002, %v1003
  %v1005 = vrot.slane %v1004, 1
  %v1006 = vmax.f32 %v1004, %v1005
  %v1007 = vmax.f32 %v666, %v668
  %v1008 = vrot.slane %v1007, 4
  %v1009 = vmax.f32 %v1007, %v1008
  %v1010 = vrot.slane %v1009, 2
  %v1011 = vmax.f32 %v1009, %v1010
  %v1012 = vrot.slane %v1011, 1
  %v1013 = vmax.f32 %v1011, %v1012
  %v1014 = vmax.f32 %v671, %v673
  %v1015 = vrot.slane %v1014, 4
  %v1016 = vmax.f32 %v1014, %v1015
  %v1017 = vrot.slane %v1016, 2
  %v1018 = vmax.f32 %v1016, %v1017
  %v1019 = vrot.slane %v1018, 1
  %v1020 = vmax.f32 %v1018, %v1019
  %v1021 = vmax.f32 %v676, %v678
  %v1022 = vrot.slane %v1021, 4
  %v1023 = vmax.f32 %v1021, %v1022
  %v1024 = vrot.slane %v1023, 2
  %v1025 = vmax.f32 %v1023, %v1024
  %v1026 = vrot.slane %v1025, 1
  %v1027 = vmax.f32 %v1025, %v1026
  %v1028 = vmax.f32 %v681, %v683
  %v1029 = vrot.slane %v1028, 4
  %v1030 = vmax.f32 %v1028, %v1029
  %v1031 = vrot.slane %v1030, 2
  %v1032 = vmax.f32 %v1030, %v1031
  %v1033 = vrot.slane %v1032, 1
  %v1034 = vmax.f32 %v1032, %v1033
  %v1035 = vmax.f32 %v686, %v688
  %v1036 = vrot.slane %v1035, 4
  %v1037 = vmax.f32 %v1035, %v1036
  %v1038 = vrot.slane %v1037, 2
  %v1039 = vmax.f32 %v1037, %v1038
  %v1040 = vrot.slane %v1039, 1
  %v1041 = vmax.f32 %v1039, %v1040
  %v1042 = vmax.f32 %v691, %v693
  %v1043 = vrot.slane %v1042, 4
  %v1044 = vmax.f32 %v1042, %v1043
  %v1045 = vrot.slane %v1044, 2
  %v1046 = vmax.f32 %v1044, %v1045
  %v1047 = vrot.slane %v1046, 1
  %v1048 = vmax.f32 %v1046, %v1047
  %v1049 = vmax.f32 %v696, %v698
  %v1050 = vrot.slane %v1049, 4
  %v1051 = vmax.f32 %v1049, %v1050
  %v1052 = vrot.slane %v1051, 2
  %v1053 = vmax.f32 %v1051, %v1052
  %v1054 = vrot.slane %v1053, 1
  %v1055 = vmax.f32 %v1053, %v1054
  %v1056 = vmax.f32 %v701, %v703
  %v1057 = vrot.slane %v1056, 4
  %v1058 = vmax.f32 %v1056, %v1057
  %v1059 = vrot.slane %v1058, 2
  %v1060 = vmax.f32 %v1058, %v1059
  %v1061 = vrot.slane %v1060, 1
  %v1062 = vmax.f32 %v1060, %v1061
  %v1063 = vmax.f32 %v706, %v708
  %v1064 = vrot.slane %v1063, 4
  %v1065 = vmax.f32 %v1063, %v1064
  %v1066 = vrot.slane %v1065, 2
  %v1067 = vmax.f32 %v1065, %v1066
  %v1068 = vrot.slane %v1067, 1
  %v1069 = vmax.f32 %v1067, %v1068
  %v1070 = vmax.f32 %v711, %v713
  %v1071 = vrot.slane %v1070, 4
  %v1072 = vmax.f32 %v1070, %v1071
  %v1073 = vrot.slane %v1072, 2
  %v1074 = vmax.f32 %v1072, %v1073
  %v1075 = vrot.slane %v1074, 1
  %v1076 = vmax.f32 %v1074, %v1075
  %v1077 = vmax.f32 %v716, %v718
  %v1078 = vrot.slane %v1077, 4
  %v1079 = vmax.f32 %v1077, %v1078
  %v1080 = vrot.slane %v1079, 2
  %v1081 = vmax.f32 %v1079, %v1080
  %v1082 = vrot.slane %v1081, 1
  %v1083 = vmax.f32 %v1081, %v1082
  %v1084 = vmax.f32 %v721, %v723
  %v1085 = vrot.slane %v1084, 4
  %v1086 = vmax.f32 %v1084, %v1085
  %v1087 = vrot.slane %v1086, 2
  %v1088 = vmax.f32 %v1086, %v1087
  %v1089 = vrot.slane %v1088, 1
  %v1090 = vmax.f32 %v1088, %v1089
  %v1091 = vmax.f32 %v726, %v728
  %v1092 = vrot.slane %v1091, 4
  %v1093 = vmax.f32 %v1091, %v1092
  %v1094 = vrot.slane %v1093, 2
  %v1095 = vmax.f32 %v1093, %v1094
  %v1096 = vrot.slane %v1095, 1
  %v1097 = vmax.f32 %v1095, %v1096
  %v1098 = vmax.f32 %v731, %v733
  %v1099 = vrot.slane %v1098, 4
  %v1100 = vmax.f32 %v1098, %v1099
  %v1101 = vrot.slane %v1100, 2
  %v1102 = vmax.f32 %v1100, %v1101
  %v1103 = vrot.slane %v1102, 1
  %v1104 = vmax.f32 %v1102, %v1103
  %v1105 = vmax.f32 %v736, %v738
  %v1106 = vrot.slane %v1105, 4
  %v1107 = vmax.f32 %v1105, %v1106
  %v1108 = vrot.slane %v1107, 2
  %v1109 = vmax.f32 %v1107, %v1108
  %v1110 = vrot.slane %v1109, 1
  %v1111 = vmax.f32 %v1109, %v1110
  %v1112 = vmax.f32 %v741, %v743
  %v1113 = vrot.slane %v1112, 4
  %v1114 = vmax.f32 %v1112, %v1113
  %v1115 = vrot.slane %v1114, 2
  %v1116 = vmax.f32 %v1114, %v1115
  %v1117 = vrot.slane %v1116, 1
  %v1118 = vmax.f32 %v1116, %v1117
  %v1119 = vmax.f32 %v746, %v748
  %v1120 = vrot.slane %v1119, 4
  %v1121 = vmax.f32 %v1119, %v1120
  %v1122 = vrot.slane %v1121, 2
  %v1123 = vmax.f32 %v1121, %v1122
  %v1124 = vrot.slane %v1123, 1
  %v1125 = vmax.f32 %v1123, %v1124
  %v1126 = vmax.f32 %v751, %v753
  %v1127 = vrot.slane %v1126, 4
  %v1128 = vmax.f32 %v1126, %v1127
  %v1129 = vrot.slane %v1128, 2
  %v1130 = vmax.f32 %v1128, %v1129
  %v1131 = vrot.slane %v1130, 1
  %v1132 = vmax.f32 %v1130, %v1131
  %v1133 = vmax.f32 %v756, %v758
  %v1134 = vrot.slane %v1133, 4
  %v1135 = vmax.f32 %v1133, %v1134
  %v1136 = vrot.slane %v1135, 2
  %v1137 = vmax.f32 %v1135, %v1136
  %v1138 = vrot.slane %v1137, 1
  %v1139 = vmax.f32 %v1137, %v1138
  %v1140 = vmax.f32 %v761, %v763
  %v1141 = vrot.slane %v1140, 4
  %v1142 = vmax.f32 %v1140, %v1141
  %v1143 = vrot.slane %v1142, 2
  %v1144 = vmax.f32 %v1142, %v1143
  %v1145 = vrot.slane %v1144, 1
  %v1146 = vmax.f32 %v1144, %v1145
  %v1147 = vmax.f32 %v766, %v768
  %v1148 = vrot.slane %v1147, 4
  %v1149 = vmax.f32 %v1147, %v1148
  %v1150 = vrot.slane %v1149, 2
  %v1151 = vmax.f32 %v1149, %v1150
  %v1152 = vrot.slane %v1151, 1
  %v1153 = vmax.f32 %v1151, %v1152
  %v1154 = vmax.f32 %v771, %v773
  %v1155 = vrot.slane %v1154, 4
  %v1156 = vmax.f32 %v1154, %v1155
  %v1157 = vrot.slane %v1156, 2
  %v1158 = vmax.f32 %v1156, %v1157
  %v1159 = vrot.slane %v1158, 1
  %v1160 = vmax.f32 %v1158, %v1159
  %v1161 = vmax.f32 %v776, %v778
  %v1162 = vrot.slane %v1161, 4
  %v1163 = vmax.f32 %v1161, %v1162
  %v1164 = vrot.slane %v1163, 2
  %v1165 = vmax.f32 %v1163, %v1164
  %v1166 = vrot.slane %v1165, 1
  %v1167 = vmax.f32 %v1165, %v1166
  %v1168 = vmax.f32 %v781, %v783
  %v1169 = vrot.slane %v1168, 4
  %v1170 = vmax.f32 %v1168, %v1169
  %v1171 = vrot.slane %v1170, 2
  %v1172 = vmax.f32 %v1170, %v1171
  %v1173 = vrot.slane %v1172, 1
  %v1174 = vmax.f32 %v1172, %v1173
  %v1175 = vmax.f32 %v786, %v788
  %v1176 = vrot.slane %v1175, 4
  %v1177 = vmax.f32 %v1175, %v1176
  %v1178 = vrot.slane %v1177, 2
  %v1179 = vmax.f32 %v1177, %v1178
  %v1180 = vrot.slane %v1179, 1
  %v1181 = vmax.f32 %v1179, %v1180
  %v1182 = vmax.f32 %v791, %v793
  %v1183 = vrot.slane %v1182, 4
  %v1184 = vmax.f32 %v1182, %v1183
  %v1185 = vrot.slane %v1184, 2
  %v1186 = vmax.f32 %v1184, %v1185
  %v1187 = vrot.slane %v1186, 1
  %v1188 = vmax.f32 %v1186, %v1187
  %v1189 = vmax.f32 %v796, %v798
  %v1190 = vrot.slane %v1189, 4
  %v1191 = vmax.f32 %v1189, %v1190
  %v1192 = vrot.slane %v1191, 2
  %v1193 = vmax.f32 %v1191, %v1192
  %v1194 = vrot.slane %v1193, 1
  %v1195 = vmax.f32 %v1193, %v1194
  %v1196 = vmax.f32 %v801, %v803
  %v1197 = vrot.slane %v1196, 4
  %v1198 = vmax.f32 %v1196, %v1197
  %v1199 = vrot.slane %v1198, 2
  %v1200 = vmax.f32 %v1198, %v1199
  %v1201 = vrot.slane %v1200, 1
  %v1202 = vmax.f32 %v1200, %v1201
  %v1203 = vmax.f32 %v806, %v808
  %v1204 = vrot.slane %v1203, 4
  %v1205 = vmax.f32 %v1203, %v1204
  %v1206 = vrot.slane %v1205, 2
  %v1207 = vmax.f32 %v1205, %v1206
  %v1208 = vrot.slane %v1207, 1
  %v1209 = vmax.f32 %v1207, %v1208
  %v1210 = vmax.f32 %v811, %v813
  %v1211 = vrot.slane %v1210, 4
  %v1212 = vmax.f32 %v1210, %v1211
  %v1213 = vrot.slane %v1212, 2
  %v1214 = vmax.f32 %v1212, %v1213
  %v1215 = vrot.slane %v1214, 1
  %v1216 = vmax.f32 %v1214, %v1215
  %v1217 = vmax.f32 %v816, %v818
  %v1218 = vrot.slane %v1217, 4
  %v1219 = vmax.f32 %v1217, %v1218
  %v1220 = vrot.slane %v1219, 2
  %v1221 = vmax.f32 %v1219, %v1220
  %v1222 = vrot.slane %v1221, 1
  %v1223 = vmax.f32 %v1221, %v1222
  %v1224 = vmax.f32 %v821, %v823
  %v1225 = vrot.slane %v1224, 4
  %v1226 = vmax.f32 %v1224, %v1225
  %v1227 = vrot.slane %v1226, 2
  %v1228 = vmax.f32 %v1226, %v1227
  %v1229 = vrot.slane %v1228, 1
  %v1230 = vmax.f32 %v1228, %v1229
  %v1231 = vmax.f32 %v826, %v828
  %v1232 = vrot.slane %v1231, 4
  %v1233 = vmax.f32 %v1231, %v1232
  %v1234 = vrot.slane %v1233, 2
  %v1235 = vmax.f32 %v1233, %v1234
  %v1236 = vrot.slane %v1235, 1
  %v1237 = vmax.f32 %v1235, %v1236
  %v1238 = vmax.f32 %v831, %v833
  %v1239 = vrot.slane %v1238, 4
  %v1240 = vmax.f32 %v1238, %v1239
  %v1241 = vrot.slane %v1240, 2
  %v1242 = vmax.f32 %v1240, %v1241
  %v1243 = vrot.slane %v1242, 1
  %v1244 = vmax.f32 %v1242, %v1243
  %v1245 = vmax.f32 %v836, %v838
  %v1246 = vrot.slane %v1245, 4
  %v1247 = vmax.f32 %v1245, %v1246
  %v1248 = vrot.slane %v1247, 2
  %v1249 = vmax.f32 %v1247, %v1248
  %v1250 = vrot.slane %v1249, 1
  %v1251 = vmax.f32 %v1249, %v1250
  %v1252 = vmax.f32 %v841, %v843
  %v1253 = vrot.slane %v1252, 4
  %v1254 = vmax.f32 %v1252, %v1253
  %v1255 = vrot.slane %v1254, 2
  %v1256 = vmax.f32 %v1254, %v1255
  %v1257 = vrot.slane %v1256, 1
  %v1258 = vmax.f32 %v1256, %v1257
  %v1259 = vmax.f32 %v846, %v848
  %v1260 = vrot.slane %v1259, 4
  %v1261 = vmax.f32 %v1259, %v1260
  %v1262 = vrot.slane %v1261, 2
  %v1263 = vmax.f32 %v1261, %v1262
  %v1264 = vrot.slane %v1263, 1
  %v1265 = vmax.f32 %v1263, %v1264
  %v1266 = vmax.f32 %v851, %v853
  %v1267 = vrot.slane %v1266, 4
  %v1268 = vmax.f32 %v1266, %v1267
  %v1269 = vrot.slane %v1268, 2
  %v1270 = vmax.f32 %v1268, %v1269
  %v1271 = vrot.slane %v1270, 1
  %v1272 = vmax.f32 %v1270, %v1271
  %v1273 = vmax.f32 %v856, %v858
  %v1274 = vrot.slane %v1273, 4
  %v1275 = vmax.f32 %v1273, %v1274
  %v1276 = vrot.slane %v1275, 2
  %v1277 = vmax.f32 %v1275, %v1276
  %v1278 = vrot.slane %v1277, 1
  %v1279 = vmax.f32 %v1277, %v1278
  %v1280 = vmax.f32 %v861, %v863
  %v1281 = vrot.slane %v1280, 4
  %v1282 = vmax.f32 %v1280, %v1281
  %v1283 = vrot.slane %v1282, 2
  %v1284 = vmax.f32 %v1282, %v1283
  %v1285 = vrot.slane %v1284, 1
  %v1286 = vmax.f32 %v1284, %v1285
  %v1287 = vmax.f32 %v866, %v868
  %v1288 = vrot.slane %v1287, 4
  %v1289 = vmax.f32 %v1287, %v1288
  %v1290 = vrot.slane %v1289, 2
  %v1291 = vmax.f32 %v1289, %v1290
  %v1292 = vrot.slane %v1291, 1
  %v1293 = vmax.f32 %v1291, %v1292
  %v1294 = vmax.f32 %v871, %v873
  %v1295 = vrot.slane %v1294, 4
  %v1296 = vmax.f32 %v1294, %v1295
  %v1297 = vrot.slane %v1296, 2
  %v1298 = vmax.f32 %v1296, %v1297
  %v1299 = vrot.slane %v1298, 1
  %v1300 = vmax.f32 %v1298, %v1299
  %v1301 = vmax.f32 %v876, %v878
  %v1302 = vrot.slane %v1301, 4
  %v1303 = vmax.f32 %v1301, %v1302
  %v1304 = vrot.slane %v1303, 2
  %v1305 = vmax.f32 %v1303, %v1304
  %v1306 = vrot.slane %v1305, 1
  %v1307 = vmax.f32 %v1305, %v1306
  %v1308 = vmax.f32 %v881, %v883
  %v1309 = vrot.slane %v1308, 4
  %v1310 = vmax.f32 %v1308, %v1309
  %v1311 = vrot.slane %v1310, 2
  %v1312 = vmax.f32 %v1310, %v1311
  %v1313 = vrot.slane %v1312, 1
  %v1314 = vmax.f32 %v1312, %v1313
  %v1315 = vmax.f32 %v886, %v888
  %v1316 = vrot.slane %v1315, 4
  %v1317 = vmax.f32 %v1315, %v1316
  %v1318 = vrot.slane %v1317, 2
  %v1319 = vmax.f32 %v1317, %v1318
  %v1320 = vrot.slane %v1319, 1
  %v1321 = vmax.f32 %v1319, %v1320
  %v1322 = vmax.f32 %v891, %v893
  %v1323 = vrot.slane %v1322, 4
  %v1324 = vmax.f32 %v1322, %v1323
  %v1325 = vrot.slane %v1324, 2
  %v1326 = vmax.f32 %v1324, %v1325
  %v1327 = vrot.slane %v1326, 1
  %v1328 = vmax.f32 %v1326, %v1327
  %v1329 = vmax.f32 %v896, %v898
  %v1330 = vrot.slane %v1329, 4
  %v1331 = vmax.f32 %v1329, %v1330
  %v1332 = vrot.slane %v1331, 2
  %v1333 = vmax.f32 %v1331, %v1332
  %v1334 = vrot.slane %v1333, 1
  %v1335 = vmax.f32 %v1333, %v1334
  %v1336 = vmax.f32 %v901, %v903
  %v1337 = vrot.slane %v1336, 4
  %v1338 = vmax.f32 %v1336, %v1337
  %v1339 = vrot.slane %v1338, 2
  %v1340 = vmax.f32 %v1338, %v1339
  %v1341 = vrot.slane %v1340, 1
  %v1342 = vmax.f32 %v1340, %v1341
  %v1343 = vmax.f32 %v906, %v908
  %v1344 = vrot.slane %v1343, 4
  %v1345 = vmax.f32 %v1343, %v1344
  %v1346 = vrot.slane %v1345, 2
  %v1347 = vmax.f32 %v1345, %v1346
  %v1348 = vrot.slane %v1347, 1
  %v1349 = vmax.f32 %v1347, %v1348
  %v1350 = vmax.f32 %v911, %v913
  %v1351 = vrot.slane %v1350, 4
  %v1352 = vmax.f32 %v1350, %v1351
  %v1353 = vrot.slane %v1352, 2
  %v1354 = vmax.f32 %v1352, %v1353
  %v1355 = vrot.slane %v1354, 1
  %v1356 = vmax.f32 %v1354, %v1355
  %v1357 = vmax.f32 %v916, %v918
  %v1358 = vrot.slane %v1357, 4
  %v1359 = vmax.f32 %v1357, %v1358
  %v1360 = vrot.slane %v1359, 2
  %v1361 = vmax.f32 %v1359, %v1360
  %v1362 = vrot.slane %v1361, 1
  %v1363 = vmax.f32 %v1361, %v1362
  %v1364 = vmax.f32 %v921, %v923
  %v1365 = vrot.slane %v1364, 4
  %v1366 = vmax.f32 %v1364, %v1365
  %v1367 = vrot.slane %v1366, 2
  %v1368 = vmax.f32 %v1366, %v1367
  %v1369 = vrot.slane %v1368, 1
  %v1370 = vmax.f32 %v1368, %v1369
  %v1371 = vmax.f32 %v926, %v928
  %v1372 = vrot.slane %v1371, 4
  %v1373 = vmax.f32 %v1371, %v1372
  %v1374 = vrot.slane %v1373, 2
  %v1375 = vmax.f32 %v1373, %v1374
  %v1376 = vrot.slane %v1375, 1
  %v1377 = vmax.f32 %v1375, %v1376
  %v1378 = vld [vmem:[%s3] sm:$0x1]
  %v1380 = vperm.slane %v1378, 0
  %v1382 = vadd.f32 %v936, %v1380
  %v1383 = vadd.f32 %v943, %v1380
  %v1384 = vadd.f32 %v950, %v1380
  %v1385 = vadd.f32 %v957, %v1380
  %v1386 = vadd.f32 %v964, %v1380
  %v1387 = vadd.f32 %v971, %v1380
  %v1388 = vadd.f32 %v978, %v1380
  %v1389 = vadd.f32 %v985, %v1380
  %v1390 = vadd.f32 %v992, %v1380
  %v1391 = vadd.f32 %v999, %v1380
  %v1392 = vadd.f32 %v1006, %v1380
  %v1393 = vadd.f32 %v1013, %v1380
  %v1394 = vadd.f32 %v1020, %v1380
  %v1395 = vadd.f32 %v1027, %v1380
  %v1396 = vadd.f32 %v1034, %v1380
  %v1397 = vadd.f32 %v1041, %v1380
  %v1398 = vadd.f32 %v1048, %v1380
  %v1399 = vadd.f32 %v1055, %v1380
  %v1400 = vadd.f32 %v1062, %v1380
  %v1401 = vadd.f32 %v1069, %v1380
  %v1402 = vadd.f32 %v1076, %v1380
  %v1403 = vadd.f32 %v1083, %v1380
  %v1404 = vadd.f32 %v1090, %v1380
  %v1405 = vadd.f32 %v1097, %v1380
  %v1406 = vadd.f32 %v1104, %v1380
  %v1407 = vadd.f32 %v1111, %v1380
  %v1408 = vadd.f32 %v1118, %v1380
  %v1409 = vadd.f32 %v1125, %v1380
  %v1410 = vadd.f32 %v1132, %v1380
  %v1411 = vadd.f32 %v1139, %v1380
  %v1412 = vadd.f32 %v1146, %v1380
  %v1413 = vadd.f32 %v1153, %v1380
  %v1414 = vadd.f32 %v1160, %v1380
  %v1415 = vadd.f32 %v1167, %v1380
  %v1416 = vadd.f32 %v1174, %v1380
  %v1417 = vadd.f32 %v1181, %v1380
  %v1418 = vadd.f32 %v1188, %v1380
  %v1419 = vadd.f32 %v1195, %v1380
  %v1420 = vadd.f32 %v1202, %v1380
  %v1421 = vadd.f32 %v1209, %v1380
  %v1422 = vadd.f32 %v1216, %v1380
  %v1423 = vadd.f32 %v1223, %v1380
  %v1424 = vadd.f32 %v1230, %v1380
  %v1425 = vadd.f32 %v1237, %v1380
  %v1426 = vadd.f32 %v1244, %v1380
  %v1427 = vadd.f32 %v1251, %v1380
  %v1428 = vadd.f32 %v1258, %v1380
  %v1429 = vadd.f32 %v1265, %v1380
  %v1430 = vadd.f32 %v1272, %v1380
  %v1431 = vadd.f32 %v1279, %v1380
  %v1432 = vadd.f32 %v1286, %v1380
  %v1433 = vadd.f32 %v1293, %v1380
  %v1434 = vadd.f32 %v1300, %v1380
  %v1435 = vadd.f32 %v1307, %v1380
  %v1436 = vadd.f32 %v1314, %v1380
  %v1437 = vadd.f32 %v1321, %v1380
  %v1438 = vadd.f32 %v1328, %v1380
  %v1439 = vadd.f32 %v1335, %v1380
  %v1440 = vadd.f32 %v1342, %v1380
  %v1441 = vadd.f32 %v1349, %v1380
  %v1442 = vadd.f32 %v1356, %v1380
  %v1443 = vadd.f32 %v1363, %v1380
  %v1444 = vadd.f32 %v1370, %v1380
  %v1445 = vadd.f32 %v1377, %v1380
  %v1446 = vmax.f32 %v1382, 0.0
  %v1447 = vmax.f32 %v1383, 0.0
  %v1448 = vmax.f32 %v1384, 0.0
  %v1449 = vmax.f32 %v1385, 0.0
  %v1450 = vmax.f32 %v1386, 0.0
  %v1451 = vmax.f32 %v1387, 0.0
  %v1452 = vmax.f32 %v1388, 0.0
  %v1453 = vmax.f32 %v1389, 0.0
  %v1454 = vmax.f32 %v1390, 0.0
  %v1455 = vmax.f32 %v1391, 0.0
  %v1456 = vmax.f32 %v1392, 0.0
  %v1457 = vmax.f32 %v1393, 0.0
  %v1458 = vmax.f32 %v1394, 0.0
  %v1459 = vmax.f32 %v1395, 0.0
  %v1460 = vmax.f32 %v1396, 0.0
  %v1461 = vmax.f32 %v1397, 0.0
  %v1462 = vmax.f32 %v1398, 0.0
  %v1463 = vmax.f32 %v1399, 0.0
  %v1464 = vmax.f32 %v1400, 0.0
  %v1465 = vmax.f32 %v1401, 0.0
  %v1466 = vmax.f32 %v1402, 0.0
  %v1467 = vmax.f32 %v1403, 0.0
  %v1468 = vmax.f32 %v1404, 0.0
  %v1469 = vmax.f32 %v1405, 0.0
  %v1470 = vmax.f32 %v1406, 0.0
  %v1471 = vmax.f32 %v1407, 0.0
  %v1472 = vmax.f32 %v1408, 0.0
  %v1473 = vmax.f32 %v1409, 0.0
  %v1474 = vmax.f32 %v1410, 0.0
  %v1475 = vmax.f32 %v1411, 0.0
  %v1476 = vmax.f32 %v1412, 0.0
  %v1477 = vmax.f32 %v1413, 0.0
  %v1478 = vmax.f32 %v1414, 0.0
  %v1479 = vmax.f32 %v1415, 0.0
  %v1480 = vmax.f32 %v1416, 0.0
  %v1481 = vmax.f32 %v1417, 0.0
  %v1482 = vmax.f32 %v1418, 0.0
  %v1483 = vmax.f32 %v1419, 0.0
  %v1484 = vmax.f32 %v1420, 0.0
  %v1485 = vmax.f32 %v1421, 0.0
  %v1486 = vmax.f32 %v1422, 0.0
  %v1487 = vmax.f32 %v1423, 0.0
  %v1488 = vmax.f32 %v1424, 0.0
  %v1489 = vmax.f32 %v1425, 0.0
  %v1490 = vmax.f32 %v1426, 0.0
  %v1491 = vmax.f32 %v1427, 0.0
  %v1492 = vmax.f32 %v1428, 0.0
  %v1493 = vmax.f32 %v1429, 0.0
  %v1494 = vmax.f32 %v1430, 0.0
  %v1495 = vmax.f32 %v1431, 0.0
  %v1496 = vmax.f32 %v1432, 0.0
  %v1497 = vmax.f32 %v1433, 0.0
  %v1498 = vmax.f32 %v1434, 0.0
  %v1499 = vmax.f32 %v1435, 0.0
  %v1500 = vmax.f32 %v1436, 0.0
  %v1501 = vmax.f32 %v1437, 0.0
  %v1502 = vmax.f32 %v1438, 0.0
  %v1503 = vmax.f32 %v1439, 0.0
  %v1504 = vmax.f32 %v1440, 0.0
  %v1505 = vmax.f32 %v1441, 0.0
  %v1506 = vmax.f32 %v1442, 0.0
  %v1507 = vmax.f32 %v1443, 0.0
  %v1508 = vmax.f32 %v1444, 0.0
  %v1509 = vmax.f32 %v1445, 0.0
  %v1510 = vpack.c.bf16 %v1446, %v1446
  %v1511 = vpack.c.bf16 %v1447, %v1447
  %v1512 = vpack.c.bf16 %v1448, %v1448
  %v1513 = vpack.c.bf16 %v1449, %v1449
  %v1514 = vpack.c.bf16 %v1450, %v1450
  %v1515 = vpack.c.bf16 %v1451, %v1451
  %v1516 = vpack.c.bf16 %v1452, %v1452
  %v1517 = vpack.c.bf16 %v1453, %v1453
  %v1518 = vpack.c.bf16 %v1454, %v1454
  %v1519 = vpack.c.bf16 %v1455, %v1455
  %v1520 = vpack.c.bf16 %v1456, %v1456
  %v1521 = vpack.c.bf16 %v1457, %v1457
  %v1522 = vpack.c.bf16 %v1458, %v1458
  %v1523 = vpack.c.bf16 %v1459, %v1459
  %v1524 = vpack.c.bf16 %v1460, %v1460
  %v1525 = vpack.c.bf16 %v1461, %v1461
  %v1526 = vpack.c.bf16 %v1462, %v1462
  %v1527 = vpack.c.bf16 %v1463, %v1463
  %v1528 = vpack.c.bf16 %v1464, %v1464
  %v1529 = vpack.c.bf16 %v1465, %v1465
  %v1530 = vpack.c.bf16 %v1466, %v1466
  %v1531 = vpack.c.bf16 %v1467, %v1467
  %v1532 = vpack.c.bf16 %v1468, %v1468
  %v1533 = vpack.c.bf16 %v1469, %v1469
  %v1534 = vpack.c.bf16 %v1470, %v1470
  %v1535 = vpack.c.bf16 %v1471, %v1471
  %v1536 = vpack.c.bf16 %v1472, %v1472
  %v1537 = vpack.c.bf16 %v1473, %v1473
  %v1538 = vpack.c.bf16 %v1474, %v1474
  %v1539 = vpack.c.bf16 %v1475, %v1475
  %v1540 = vpack.c.bf16 %v1476, %v1476
  %v1541 = vpack.c.bf16 %v1477, %v1477
  %v1542 = vpack.c.bf16 %v1478, %v1478
  %v1543 = vpack.c.bf16 %v1479, %v1479
  %v1544 = vpack.c.bf16 %v1480, %v1480
  %v1545 = vpack.c.bf16 %v1481, %v1481
  %v1546 = vpack.c.bf16 %v1482, %v1482
  %v1547 = vpack.c.bf16 %v1483, %v1483
  %v1548 = vpack.c.bf16 %v1484, %v1484
  %v1549 = vpack.c.bf16 %v1485, %v1485
  %v1550 = vpack.c.bf16 %v1486, %v1486
  %v1551 = vpack.c.bf16 %v1487, %v1487
  %v1552 = vpack.c.bf16 %v1488, %v1488
  %v1553 = vpack.c.bf16 %v1489, %v1489
  %v1554 = vpack.c.bf16 %v1490, %v1490
  %v1555 = vpack.c.bf16 %v1491, %v1491
  %v1556 = vpack.c.bf16 %v1492, %v1492
  %v1557 = vpack.c.bf16 %v1493, %v1493
  %v1558 = vpack.c.bf16 %v1494, %v1494
  %v1559 = vpack.c.bf16 %v1495, %v1495
  %v1560 = vpack.c.bf16 %v1496, %v1496
  %v1561 = vpack.c.bf16 %v1497, %v1497
  %v1562 = vpack.c.bf16 %v1498, %v1498
  %v1563 = vpack.c.bf16 %v1499, %v1499
  %v1564 = vpack.c.bf16 %v1500, %v1500
  %v1565 = vpack.c.bf16 %v1501, %v1501
  %v1566 = vpack.c.bf16 %v1502, %v1502
  %v1567 = vpack.c.bf16 %v1503, %v1503
  %v1568 = vpack.c.bf16 %v1504, %v1504
  %v1569 = vpack.c.bf16 %v1505, %v1505
  %v1570 = vpack.c.bf16 %v1506, %v1506
  %v1571 = vpack.c.bf16 %v1507, %v1507
  %v1572 = vpack.c.bf16 %v1508, %v1508
  %v1573 = vpack.c.bf16 %v1509, %v1509
  %v1574 = vld [vmem:[%s4] sm:$0xf]
  %v1575 = vld [vmem:[%s4 + $0x4] sm:$0xf]
  %v1576 = vld [vmem:[%s4 + $0x8] sm:$0xf]
  %v1577 = vld [vmem:[%s4 + $0xc] sm:$0xf]
  %v1578 = vld [vmem:[%s4 + $0x10] sm:$0xf]
  %v1579 = vld [vmem:[%s4 + $0x14] sm:$0xf]
  %v1580 = vld [vmem:[%s4 + $0x18] sm:$0xf]
  %v1581 = vld [vmem:[%s4 + $0x1c] sm:$0xf]
  %v1582 = vld [vmem:[%s4 + $0x20] sm:$0xf]
  %v1583 = vld [vmem:[%s4 + $0x24] sm:$0xf]
  %v1584 = vld [vmem:[%s4 + $0x28] sm:$0xf]
  %v1585 = vld [vmem:[%s4 + $0x2c] sm:$0xf]
  %v1586 = vld [vmem:[%s4 + $0x30] sm:$0xf]
  %v1587 = vld [vmem:[%s4 + $0x34] sm:$0xf]
  %v1588 = vld [vmem:[%s4 + $0x38] sm:$0xf]
  %v1589 = vld [vmem:[%s4 + $0x3c] sm:$0xf]
  %v1590 = vld [vmem:[%s5] sm:$0x1]
  %v1592 = vperm.slane %v1590, 0
  %v1658 = vunpack.c.l.b16 %v1510
  %v1659 = vunpack.c.l.b16 %v1511
  %v1660 = vunpack.c.l.b16 %v1512
  %v1661 = vunpack.c.l.b16 %v1513
  %v1662 = vunpack.c.l.b16 %v1514
  %v1663 = vunpack.c.l.b16 %v1515
  %v1664 = vunpack.c.l.b16 %v1516
  %v1665 = vunpack.c.l.b16 %v1517
  %v1666 = vunpack.c.l.b16 %v1518
  %v1667 = vunpack.c.l.b16 %v1519
  %v1668 = vunpack.c.l.b16 %v1520
  %v1669 = vunpack.c.l.b16 %v1521
  %v1670 = vunpack.c.l.b16 %v1522
  %v1671 = vunpack.c.l.b16 %v1523
  %v1672 = vunpack.c.l.b16 %v1524
  %v1673 = vunpack.c.l.b16 %v1525
  %v1674 = vunpack.c.l.b16 %v1526
  %v1675 = vunpack.c.l.b16 %v1527
  %v1676 = vunpack.c.l.b16 %v1528
  %v1677 = vunpack.c.l.b16 %v1529
  %v1678 = vunpack.c.l.b16 %v1530
  %v1679 = vunpack.c.l.b16 %v1531
  %v1680 = vunpack.c.l.b16 %v1532
  %v1681 = vunpack.c.l.b16 %v1533
  %v1682 = vunpack.c.l.b16 %v1534
  %v1683 = vunpack.c.l.b16 %v1535
  %v1684 = vunpack.c.l.b16 %v1536
  %v1685 = vunpack.c.l.b16 %v1537
  %v1686 = vunpack.c.l.b16 %v1538
  %v1687 = vunpack.c.l.b16 %v1539
  %v1688 = vunpack.c.l.b16 %v1540
  %v1689 = vunpack.c.l.b16 %v1541
  %v1690 = vunpack.c.l.b16 %v1542
  %v1691 = vunpack.c.l.b16 %v1543
  %v1692 = vunpack.c.l.b16 %v1544
  %v1693 = vunpack.c.l.b16 %v1545
  %v1694 = vunpack.c.l.b16 %v1546
  %v1695 = vunpack.c.l.b16 %v1547
  %v1696 = vunpack.c.l.b16 %v1548
  %v1697 = vunpack.c.l.b16 %v1549
  %v1698 = vunpack.c.l.b16 %v1550
  %v1699 = vunpack.c.l.b16 %v1551
  %v1700 = vunpack.c.l.b16 %v1552
  %v1701 = vunpack.c.l.b16 %v1553
  %v1702 = vunpack.c.l.b16 %v1554
  %v1703 = vunpack.c.l.b16 %v1555
  %v1704 = vunpack.c.l.b16 %v1556
  %v1705 = vunpack.c.l.b16 %v1557
  %v1706 = vunpack.c.l.b16 %v1558
  %v1707 = vunpack.c.l.b16 %v1559
  %v1708 = vunpack.c.l.b16 %v1560
  %v1709 = vunpack.c.l.b16 %v1561
  %v1710 = vunpack.c.l.b16 %v1562
  %v1711 = vunpack.c.l.b16 %v1563
  %v1712 = vunpack.c.l.b16 %v1564
  %v1713 = vunpack.c.l.b16 %v1565
  %v1714 = vunpack.c.l.b16 %v1566
  %v1715 = vunpack.c.l.b16 %v1567
  %v1716 = vunpack.c.l.b16 %v1568
  %v1717 = vunpack.c.l.b16 %v1569
  %v1718 = vunpack.c.l.b16 %v1570
  %v1719 = vunpack.c.l.b16 %v1571
  %v1720 = vunpack.c.l.b16 %v1572
  %v1721 = vunpack.c.l.b16 %v1573
  %v1722 = vrot.slane %v1659, 7
  %vm1723 = vcmask 1041409
  %v1724 = vsel %vm1723, %v1722, %v1658
  %v1725 = vrot.slane %v1660, 6
  %vm1726 = vcmask 1042434
  %v1727 = vsel %vm1726, %v1725, %v1724
  %v1728 = vrot.slane %v1661, 5
  %vm1729 = vcmask 1043459
  %v1730 = vsel %vm1729, %v1728, %v1727
  %v1731 = vrot.slane %v1662, 4
  %vm1732 = vcmask 1044484
  %v1733 = vsel %vm1732, %v1731, %v1730
  %v1734 = vrot.slane %v1663, 3
  %vm1735 = vcmask 1045509
  %v1736 = vsel %vm1735, %v1734, %v1733
  %v1737 = vrot.slane %v1664, 2
  %vm1738 = vcmask 1046534
  %v1739 = vsel %vm1738, %v1737, %v1736
  %v1740 = vrot.slane %v1665, 1
  %vm1741 = vcmask 1047559
  %v1742 = vsel %vm1741, %v1740, %v1739
  %v1743 = vrot.slane %v1667, 7
  %v1744 = vsel %vm1723, %v1743, %v1666
  %v1745 = vrot.slane %v1668, 6
  %v1746 = vsel %vm1726, %v1745, %v1744
  %v1747 = vrot.slane %v1669, 5
  %v1748 = vsel %vm1729, %v1747, %v1746
  %v1749 = vrot.slane %v1670, 4
  %v1750 = vsel %vm1732, %v1749, %v1748
  %v1751 = vrot.slane %v1671, 3
  %v1752 = vsel %vm1735, %v1751, %v1750
  %v1753 = vrot.slane %v1672, 2
  %v1754 = vsel %vm1738, %v1753, %v1752
  %v1755 = vrot.slane %v1673, 1
  %v1756 = vsel %vm1741, %v1755, %v1754
  %v1757 = vrot.slane %v1675, 7
  %v1758 = vsel %vm1723, %v1757, %v1674
  %v1759 = vrot.slane %v1676, 6
  %v1760 = vsel %vm1726, %v1759, %v1758
  %v1761 = vrot.slane %v1677, 5
  %v1762 = vsel %vm1729, %v1761, %v1760
  %v1763 = vrot.slane %v1678, 4
  %v1764 = vsel %vm1732, %v1763, %v1762
  %v1765 = vrot.slane %v1679, 3
  %v1766 = vsel %vm1735, %v1765, %v1764
  %v1767 = vrot.slane %v1680, 2
  %v1768 = vsel %vm1738, %v1767, %v1766
  %v1769 = vrot.slane %v1681, 1
  %v1770 = vsel %vm1741, %v1769, %v1768
  %v1771 = vrot.slane %v1683, 7
  %v1772 = vsel %vm1723, %v1771, %v1682
  %v1773 = vrot.slane %v1684, 6
  %v1774 = vsel %vm1726, %v1773, %v1772
  %v1775 = vrot.slane %v1685, 5
  %v1776 = vsel %vm1729, %v1775, %v1774
  %v1777 = vrot.slane %v1686, 4
  %v1778 = vsel %vm1732, %v1777, %v1776
  %v1779 = vrot.slane %v1687, 3
  %v1780 = vsel %vm1735, %v1779, %v1778
  %v1781 = vrot.slane %v1688, 2
  %v1782 = vsel %vm1738, %v1781, %v1780
  %v1783 = vrot.slane %v1689, 1
  %v1784 = vsel %vm1741, %v1783, %v1782
  %v1785 = vrot.slane %v1691, 7
  %v1786 = vsel %vm1723, %v1785, %v1690
  %v1787 = vrot.slane %v1692, 6
  %v1788 = vsel %vm1726, %v1787, %v1786
  %v1789 = vrot.slane %v1693, 5
  %v1790 = vsel %vm1729, %v1789, %v1788
  %v1791 = vrot.slane %v1694, 4
  %v1792 = vsel %vm1732, %v1791, %v1790
  %v1793 = vrot.slane %v1695, 3
  %v1794 = vsel %vm1735, %v1793, %v1792
  %v1795 = vrot.slane %v1696, 2
  %v1796 = vsel %vm1738, %v1795, %v1794
  %v1797 = vrot.slane %v1697, 1
  %v1798 = vsel %vm1741, %v1797, %v1796
  %v1799 = vrot.slane %v1699, 7
  %v1800 = vsel %vm1723, %v1799, %v1698
  %v1801 = vrot.slane %v1700, 6
  %v1802 = vsel %vm1726, %v1801, %v1800
  %v1803 = vrot.slane %v1701, 5
  %v1804 = vsel %vm1729, %v1803, %v1802
  %v1805 = vrot.slane %v1702, 4
  %v1806 = vsel %vm1732, %v1805, %v1804
  %v1807 = vrot.slane %v1703, 3
  %v1808 = vsel %vm1735, %v1807, %v1806
  %v1809 = vrot.slane %v1704, 2
  %v1810 = vsel %vm1738, %v1809, %v1808
  %v1811 = vrot.slane %v1705, 1
  %v1812 = vsel %vm1741, %v1811, %v1810
  %v1813 = vrot.slane %v1707, 7
  %v1814 = vsel %vm1723, %v1813, %v1706
  %v1815 = vrot.slane %v1708, 6
  %v1816 = vsel %vm1726, %v1815, %v1814
  %v1817 = vrot.slane %v1709, 5
  %v1818 = vsel %vm1729, %v1817, %v1816
  %v1819 = vrot.slane %v1710, 4
  %v1820 = vsel %vm1732, %v1819, %v1818
  %v1821 = vrot.slane %v1711, 3
  %v1822 = vsel %vm1735, %v1821, %v1820
  %v1823 = vrot.slane %v1712, 2
  %v1824 = vsel %vm1738, %v1823, %v1822
  %v1825 = vrot.slane %v1713, 1
  %v1826 = vsel %vm1741, %v1825, %v1824
  %v1827 = vrot.slane %v1715, 7
  %v1828 = vsel %vm1723, %v1827, %v1714
  %v1829 = vrot.slane %v1716, 6
  %v1830 = vsel %vm1726, %v1829, %v1828
  %v1831 = vrot.slane %v1717, 5
  %v1832 = vsel %vm1729, %v1831, %v1830
  %v1833 = vrot.slane %v1718, 4
  %v1834 = vsel %vm1732, %v1833, %v1832
  %v1835 = vrot.slane %v1719, 3
  %v1836 = vsel %vm1735, %v1835, %v1834
  %v1837 = vrot.slane %v1720, 2
  %v1838 = vsel %vm1738, %v1837, %v1836
  %v1839 = vrot.slane %v1721, 1
  %v1840 = vsel %vm1741, %v1839, %v1838
  %v1841 = vpack.c.b16 %v1756, %v1742
  %v1842 = vpack.c.b16 %v1784, %v1770
  %v1843 = vpack.c.b16 %v1812, %v1798
  %v1844 = vpack.c.b16 %v1840, %v1826
  %v1865 = vunpack.c.l.b16 %v1574
  %v1866 = vunpack.c.l.b16 %v1575
  %v1867 = vunpack.c.l.b16 %v1576
  %v1868 = vunpack.c.l.b16 %v1577
  %v1869 = vunpack.c.l.b16 %v1578
  %v1870 = vunpack.c.l.b16 %v1579
  %v1871 = vunpack.c.l.b16 %v1580
  %v1872 = vunpack.c.l.b16 %v1581
  %v1873 = vunpack.c.l.b16 %v1582
  %v1874 = vunpack.c.l.b16 %v1583
  %v1875 = vunpack.c.l.b16 %v1584
  %v1876 = vunpack.c.l.b16 %v1585
  %v1877 = vunpack.c.l.b16 %v1586
  %v1878 = vunpack.c.l.b16 %v1587
  %v1879 = vunpack.c.l.b16 %v1588
  %v1880 = vunpack.c.l.b16 %v1589
  %v1881 = vpack.c.b16 %v1866, %v1865
  %v1882 = vpack.c.b16 %v1868, %v1867
  %v1883 = vpack.c.b16 %v1870, %v1869
  %v1884 = vpack.c.b16 %v1872, %v1871
  %v1885 = vpack.c.b16 %v1874, %v1873
  %v1886 = vpack.c.b16 %v1876, %v1875
  %v1887 = vpack.c.b16 %v1878, %v1877
  %v1888 = vpack.c.b16 %v1880, %v1879
  %1897 = vmatpush.bf16.msra.mxu0 %v1888
  %1898 = vmatpush.bf16.msra.mxu0 %v1887
  %1899 = vmatpush.bf16.msra.mxu0 %v1886
  %1900 = vmatpush.bf16.msra.mxu0 %v1885
  %1901 = vmatpush.bf16.msra.mxu0 %v1884
  %1902 = vmatpush.bf16.msra.mxu0 %v1883
  %1903 = vmatpush.bf16.msra.mxu0 %v1882
  %1904 = vmatpush.bf16.msra.mxu0 %v1881
  %1905 = vmatmul.bf16.gmra.mxu0 %v1841
  %v1906 = vpop.f32.mrf.mxu0
  %v1907 = vadd.f32 %v1592, %v1906
  %v1908 = vpop.f32.mrf.mxu0
  %v1909 = vadd.f32 %v1592, %v1908
  %1910 = vmatmul.bf16.gmra.mxu0 %v1842
  %v1911 = vpop.f32.mrf.mxu0
  %v1912 = vadd.f32 %v1592, %v1911
  %v1913 = vpop.f32.mrf.mxu0
  %v1914 = vadd.f32 %v1592, %v1913
  %1915 = vmatmul.bf16.gmra.mxu0 %v1843
  %v1916 = vpop.f32.mrf.mxu0
  %v1917 = vadd.f32 %v1592, %v1916
  %v1918 = vpop.f32.mrf.mxu0
  %v1919 = vadd.f32 %v1592, %v1918
  %1920 = vmatmul.bf16.gmra.mxu0 %v1844
  %v1921 = vpop.f32.mrf.mxu0
  %v1922 = vadd.f32 %v1592, %v1921
  %v1923 = vpop.f32.mrf.mxu0
  %v1924 = vadd.f32 %v1592, %v1923
  %1925 = vdwg.mxu0
  %1926 = vst [vmem:[%s6] sm:$0xff] %v1907
  %1927 = vst [vmem:[%s6 + $0x8] sm:$0xff] %v1909
  %1928 = vst [vmem:[%s6 + $0x10] sm:$0xff] %v1912
  %1929 = vst [vmem:[%s6 + $0x18] sm:$0xff] %v1914
  %1930 = vst [vmem:[%s6 + $0x20] sm:$0xff] %v1917
  %1931 = vst [vmem:[%s6 + $0x28] sm:$0xff] %v1919
  %1932 = vst [vmem:[%s6 + $0x30] sm:$0xff] %v1922
  %1933 = vst [vmem:[%s6 + $0x38] sm:$0xff] %v1924
  // Predicated region
  $region26: #{textcnn_forward.1} parent=0 // pred_check
    _
  $region27: #{textcnn_forward.1} parent=0 // pred_check_branch
    %1935 = sbr.rel (0) target = $region29
  $region28: #{textcnn_forward.1} parent=0 // pred_region
    _
  $region29: #{textcnn_forward.1} parent=0 // pred_fallthru
    _
  // Predicated region
  $region30: #{textcnn_forward.1} parent=0 // pred_check
    _
  $region31: #{textcnn_forward.1} parent=0 // pred_check_branch
    %1937 = sbr.rel (0) target = $region33
  $region32: #{textcnn_forward.1} parent=0 // pred_region
    _
  $region33: #{textcnn_forward.1} parent=0 // pred_fallthru
    _

</llo_original>
